<compile_context>
chip_gen: v7x
topology: tpu7x:2x2x1
jax: 0.10.0
libtpu: 0.0.40
codegen_flags: <defaults>
</compile_context>

<pallas_src>
import functools
import numpy as np
import jax
import jax.numpy as jnp
from jax import lax
from jax.experimental import pallas as pl
from jax.experimental.pallas import tpu as pltpu

SAMPLE_RATE = 22050
FREQ_BANDS = {
    "delta": (1, 4), "theta": (4, 8), "alpha": (8, 13),
    "beta": (13, 30), "gamma": (30, 100), "high_gamma": (100, 200),
}
BAND_WEIGHT_INIT = 0.5          # nn.Parameter(torch.tensor([0.5])) -- deterministic init
CONV_K, CONV_STRIDE, CONV_PAD = 5, 2, 2
NFP = 256                       # rfft bins zero-padded to a full lane tile


def _conv_out_len(lin):
    return (lin + 2 * CONV_PAD - CONV_K) // CONV_STRIDE + 1


# ----------------------------------------------------------------------------
# Compile-time spectral constants (shape-only, numpy, baked by jit)
# ----------------------------------------------------------------------------
def _spectral_constants(L, sample_rate, nfp):
    """Stacked forward rDFT [L, 2*nfp] with the EEG-band multiplier folded in, and
    stacked inverse rDFT [L, 2*nfp] restricted to the first L output samples.
    The frequency axis is zero-padded to `nfp` lanes; padded bins are exact zeros
    on the forward side and have zero inverse columns, so they cannot contaminate
    the result."""
    n_fft = 2 ** int(np.ceil(np.log2(L)))
    n_freq = n_fft // 2 + 1
    # The reference multiplies an [n_freq] mask by an [L] time modulation
    # elementwise; that broadcast is only defined when L == n_freq.
    assert L == n_freq, "reference semantics require L == n_fft//2 + 1"
    assert nfp >= n_freq

    freqs = np.fft.rfftfreq(n_fft, d=1.0 / sample_rate)
    t = np.arange(L, dtype=np.float64)
    mult = np.ones(n_freq, dtype=np.float64)
    for _band, (low, high) in FREQ_BANDS.items():
        center = (low + high) / 2.0
        width = (high - low) / 2.0
        mask = np.exp(-0.5 * ((freqs - center) / (width / 2.0)) ** 2)
        mask = np.where(freqs < low, 0.0, mask)
        mask = np.where(freqs > high, 0.0, mask)
        if np.any(mask > 0.01):     # static, input-independent gate (matches torch.any)
            time_mod = np.sin(2.0 * np.pi * center * t / sample_rate)
            mult = mult * (1.0 + mask * (BAND_WEIGHT_INIT * (1.0 + 0.2 * time_mod)))
    # TODO(synk): specific_freqs harmonic enhancement skipped -- the reference's
    # get_harmonic_progression(t) calls int() on a length-L tensor, which raises,
    # so that branch has no defined semantics for this forward.

    n = np.arange(L, dtype=np.float64)[:, None]
    f = np.arange(n_freq, dtype=np.float64)[None, :]
    ang = 2.0 * np.pi * n * f / n_fft                          # [L, n_freq]

    # x_row @ fwd -> [X_re (nfp lanes) | X_im (nfp lanes)], multiplier folded in.
    fwd = np.zeros((L, 2 * nfp), dtype=np.float64)
    fwd[:, :n_freq] = mult[None, :] * np.cos(ang)
    fwd[:, nfp:nfp + n_freq] = -mult[None, :] * np.sin(ang)

    # audio[n] = inv[n, :] . [Y_re | Y_im]  == irfft(Y, n=n_fft)[:L]
    ck = np.full(n_freq, 2.0)
    ck[0] = 1.0
    ck[-1] = 1.0
    inv = np.zeros((L, 2 * nfp), dtype=np.float64)
    inv[:, :n_freq] = (ck[None, :] * np.cos(ang)) / n_fft
    inv[:, nfp:nfp + n_freq] = -(ck[None, :] * np.sin(ang)) / n_fft
    return fwd, inv, n_freq


# ----------------------------------------------------------------------------
# Fused Pallas kernel: spectral modulation -> 3 strided convs -> mixer MLP
# ----------------------------------------------------------------------------
def _fused_kernel(x_ref, fwd_ref, inv_ref, w1_ref, w2_ref, w3_ref, wm1_ref, pk_ref,
                  o_ref, pad1_ref, pad2_ref, pad3_ref, *, n_freq, nfp, louts):
    f32 = jnp.float32
    l1, l2, l3 = louts

    def leaky(v):                                       # LeakyReLU(0.2)
        return jnp.where(v > 0.0, v, 0.2 * v)

    # --- FrequencyModulationLayer (lane-dense rows): rfft with band modulation
    #     folded into fwd -> magnitude smoothing with phase preservation ->
    #     irfft[:L] as one transposed-RHS dot producing the [L, 1] audio column.
    x = x_ref[...]                                                        # [1, L]
    xf = jnp.dot(x, fwd_ref[...], preferred_element_type=f32)             # [1, 2*nfp]
    xre, xim = xf[:, :nfp], xf[:, nfp:]
    mag = jnp.sqrt(xre * xre + xim * xim)                                 # [1, nfp]
    # tridiagonal smoothing (0.15, 0.7, 0.15); first/last real bins pass through
    smoothed = (0.7 * mag
                + 0.15 * pltpu.roll(mag, 1, 1)            # mag[i-1] (wrap harmless)
                + 0.15 * pltpu.roll(mag, nfp - 1, 1))     # mag[i+1]
    bin_idx = lax.broadcasted_iota(jnp.int32, (1, nfp), 1)
    edge = (bin_idx == 0) | (bin_idx == n_freq - 1)
    mag_s = jnp.where(edge, mag, smoothed)
    pos = mag > 0.0
    ratio = mag_s * pl.reciprocal(jnp.where(pos, mag, 1.0), approx=False)
    yre = jnp.where(pos, xre * ratio, mag_s)              # angle(0)=0 -> real output
    yim = jnp.where(pos, xim * ratio, 0.0)
    yfull = jnp.concatenate([yre, yim], axis=1)                           # [1, 2*nfp]
    # contracts lane dim of yfull against inv's columns (q @ k.T - style NT dot)
    audio = lax.dot_general(inv_ref[...], yfull, (((1,), (1,)), ((), ())),
                            preferred_element_type=f32)                   # [L, 1]

    # --- instrument_net: 3 x (Conv1d k=5 s=2 p=2 + LeakyReLU(0.2)) in [L, C] ----
    def conv(pad_ref, h, w_ref, b, lout):
        # zero-padded [Lin+4, Cin] scratch; tap k = sublane-strided read (stride 2)
        pad_ref[...] = jnp.zeros_like(pad_ref)
        pad_ref[CONV_PAD:CONV_PAD + h.shape[0], :] = h
        taps = [pad_ref[pl.ds(k, lout, stride=CONV_STRIDE), :]
                for k in range(CONV_K)]
        if h.shape[1] == 1:
            # Cin == 1: five broadcast multiply-adds beat a K=5 matmul
            acc = jnp.zeros((lout, w_ref.shape[1]), f32)
            for k in range(CONV_K):
                acc = acc + taps[k] * w_ref[k:k + 1, :]           # [lout,1]*[1,Cout]
            y = acc + b
        else:
            # one [lout, 5*Cin] @ [5*Cin, Cout] MXU matmul (taps stacked on K)
            sel = jnp.concatenate(taps, axis=1)
            y = jnp.dot(sel, w_ref[...], preferred_element_type=f32) + b
        return leaky(y)

    b1 = pk_ref[:, 0:32]
    b2 = pk_ref[:, 128:192]
    b3 = pk_ref[:, 256:384]
    h1 = conv(pad1_ref, audio, w1_ref, b1, l1)     # [65, 32]
    h2 = conv(pad2_ref, h1, w2_ref, b2, l2)        # [33, 64]
    h3 = conv(pad3_ref, h2, w3_ref, b3, l3)        # [17, 128]

    # --- mixer: mean over length, zero instrument_emb half dropped,
    #     Linear(192,256) + LeakyReLU(0.2) + Linear(256,1) -----------------------
    feat = jnp.mean(h3, axis=0, keepdims=True)                            # [1, 128]
    bm1 = pk_ref[:, 384:640]
    wm2 = pk_ref[:, 640:896]
    bm2 = pk_ref[:, 896:897]
    hm = leaky(jnp.dot(feat, wm1_ref[...], preferred_element_type=f32) + bm1)
    o_ref[...] = jnp.sum(hm * wm2, axis=1, keepdims=True) + bm2           # [1, 1]


# ----------------------------------------------------------------------------
# Jitted wrapper (parameter re-layout + constant baking + one pallas_call)
# ----------------------------------------------------------------------------
@jax.jit
def instrument_enhanced_generator_forward(z, condition, params):
    """InstrumentEnhancedGenerator.forward(z, condition, instrument_idx=None)."""
    del condition                    # accepted but unused by the reference forward
    B, C, L = z.shape
    assert B == 1 and C == 1         # reference concatenates with torch.zeros(1, 64)

    fwd_np, inv_np, n_freq = _spectral_constants(L, SAMPLE_RATE, NFP)
    l1 = _conv_out_len(L)
    l2 = _conv_out_len(l1)
    l3 = _conv_out_len(l2)
    fwd = jnp.asarray(fwd_np, jnp.float32)
    inv = jnp.asarray(inv_np, jnp.float32)

    (cw1, cb1), (cw2, cb2), (cw3, cb3) = params["convs"]
    mw1, mb1 = params["mix1"]                    # [256, 192], [256]
    mw2, mb2 = params["mix2"]                    # [1, 256],  [1]

    def cat_w(cw):                               # [Cout, Cin, K] -> [K*Cin, Cout]
        cout, cin, k = cw.shape
        return jnp.transpose(cw, (2, 1, 0)).reshape(k * cin, cout).astype(jnp.float32)

    w1c, w2c, w3c = cat_w(cw1), cat_w(cw2), cat_w(cw3)   # [5,32] [160,64] [320,128]
    # instrument_idx is None -> instrument_emb == zeros(1, 64); its half of the
    # first mixer Linear contributes exactly zero, so only the feature half is kept.
    feat_dim = cw3.shape[0]                              # 128
    wm1 = jnp.transpose(mw1[:, :feat_dim]).astype(jnp.float32)            # [128, 256]

    def pad_to(v, n):
        v = jnp.asarray(v, jnp.float32).reshape(-1)
        return jnp.pad(v, (0, n - v.shape[0]))

    # Small vectors packed into one lane-aligned [1, 1024] operand:
    #   [b1@0 | b2@128 | b3@256 | bm1@384 | wm2@640 | bm2@896]
    packed = jnp.concatenate(
        [pad_to(cb1, 128), pad_to(cb2, 128), pad_to(cb3, 128),
         pad_to(mb1, 256), pad_to(mw2, 256), pad_to(mb2, 128)]).reshape(1, 1024)

    x_row = z.reshape(1, L).astype(jnp.float32)

    kernel = functools.partial(_fused_kernel, n_freq=n_freq, nfp=NFP,
                               louts=(l1, l2, l3))
    out = pl.pallas_call(
        kernel,
        out_shape=jax.ShapeDtypeStruct((1, 1), jnp.float32),
        scratch_shapes=[
            pltpu.VMEM((L + 2 * CONV_PAD, 1), jnp.float32),               # conv1 pad
            pltpu.VMEM((l1 + 2 * CONV_PAD, cw1.shape[0]), jnp.float32),   # conv2 pad
            pltpu.VMEM((l2 + 2 * CONV_PAD, cw2.shape[0]), jnp.float32),   # conv3 pad
        ],
    )(x_row, fwd, inv, w1c, w2c, w3c, wm1, packed)

    # TODO(synk): instrument_idx branch (librosa sample loading + 0.7/0.3 mix)
    # requires file I/O and is not exercised here (instrument_idx=None).
    return out


# ----------------------------------------------------------------------------
# Deterministic parameter init (matches __init__ shapes; synthetic values)
# ----------------------------------------------------------------------------
def init_params(key):
    ks = jax.random.split(key, 10)
    convs = [
        (0.10 * jax.random.normal(ks[0], (32, 1, 5), jnp.float32),
         0.01 * jax.random.normal(ks[1], (32,), jnp.float32)),
        (0.10 * jax.random.normal(ks[2], (64, 32, 5), jnp.float32),
         0.01 * jax.random.normal(ks[3], (64,), jnp.float32)),
        (0.10 * jax.random.normal(ks[4], (128, 64, 5), jnp.float32),
         0.01 * jax.random.normal(ks[5], (128,), jnp.float32)),
    ]
    mix1 = (0.05 * jax.random.normal(ks[6], (256, 192), jnp.float32),
            0.01 * jax.random.normal(ks[7], (256,), jnp.float32))
    mix2 = (0.05 * jax.random.normal(ks[8], (1, 256), jnp.float32),
            0.01 * jax.random.normal(ks[9], (1,), jnp.float32))
    # band_weights are the deterministic 0.5 init (folded into the DFT multiplier).
    # instrument_embedding / freq_weights / harmonic_progression / time_modulation
    # are only used on code paths not exercised (or not executable) in this forward.
    return {"convs": convs, "mix1": mix1, "mix2": mix2}


if __name__ == "__main__":
    key = jax.random.PRNGKey(0)
    kz, kc, kp = jax.random.split(key, 3)
    L = 129  # = n_fft//2 + 1 (n_fft = 256) so the reference band broadcast is well-defined
    z = jax.random.normal(kz, (1, 1, L), jnp.float32)          # [B, C, L]
    condition = jax.random.normal(kc, (1, 8), jnp.float32)     # unused by the forward
    params = init_params(kp)

    out = instrument_enhanced_generator_forward(z, condition, params)
    out = jax.block_until_ready(out)
    assert out.shape == (1, 1)
    assert bool(jnp.all(jnp.isfinite(out)))
    print("KERNEL_OK")
</pallas_src>

<mosaic_0001>
module attributes {stable_mosaic.version = 11 : i64} {
  func.func @_fused_kernel(%arg0: memref<1x129xf32, #tpu.memory_space<vmem>>, %arg1: memref<129x512xf32, #tpu.memory_space<vmem>>, %arg2: memref<129x512xf32, #tpu.memory_space<vmem>>, %arg3: memref<5x32xf32, #tpu.memory_space<vmem>>, %arg4: memref<160x64xf32, #tpu.memory_space<vmem>>, %arg5: memref<320x128xf32, #tpu.memory_space<vmem>>, %arg6: memref<128x256xf32, #tpu.memory_space<vmem>>, %arg7: memref<1x1024xf32, #tpu.memory_space<vmem>>, %arg8: memref<1x1xf32, #tpu.memory_space<vmem>>, %arg9: memref<133x1xf32, #tpu.memory_space<vmem>>, %arg10: memref<69x32xf32, #tpu.memory_space<vmem>>, %arg11: memref<37x64xf32, #tpu.memory_space<vmem>>) attributes {dimension_semantics = [], scalar_prefetch = 0 : i64, scratch_operands = 3 : i64, tpu.core_type = #tpu.core_type<tc>} {
    %c0 = arith.constant 0 : index
    %c0_0 = arith.constant 0 : index
    %0 = vector.load %arg0[%c0, %c0_0] : memref<1x129xf32, #tpu.memory_space<vmem>>, vector<1x129xf32>
    %c0_1 = arith.constant 0 : index
    %c0_2 = arith.constant 0 : index
    %1 = vector.load %arg1[%c0_1, %c0_2] : memref<129x512xf32, #tpu.memory_space<vmem>>, vector<129x512xf32>
    %cst = arith.constant dense<0.000000e+00> : vector<1x512xf32>
    %2 = tpu.matmul %0, %1, %cst {dimension_numbers = #tpu.dot_dimension_numbers<[1], [0], [0], [1], [0, 0, 1, 1], [], []>} : vector<1x129xf32>, vector<129x512xf32>, vector<1x512xf32> -> vector<1x512xf32>
    %3 = vector.extract_strided_slice %2 {offsets = [0, 0], sizes = [1, 256], strides = [1, 1]} : vector<1x512xf32> to vector<1x256xf32>
    %4 = vector.extract_strided_slice %2 {offsets = [0, 256], sizes = [1, 256], strides = [1, 1]} : vector<1x512xf32> to vector<1x256xf32>
    %5 = arith.mulf %3, %3 : vector<1x256xf32>
    %6 = arith.mulf %4, %4 : vector<1x256xf32>
    %7 = arith.addf %5, %6 : vector<1x256xf32>
    %8 = math.sqrt %7 : vector<1x256xf32>
    %cst_3 = arith.constant 0.699999988 : f32
    %9 = vector.broadcast %cst_3 : f32 to vector<1x256xf32>
    %10 = arith.mulf %9, %8 : vector<1x256xf32>
    %c1_i32 = arith.constant 1 : i32
    %11 = tpu.dynamic_rotate %8 by %c1_i32 dim 1 : vector<1x256xf32>, i32 -> vector<1x256xf32>
    %cst_4 = arith.constant 1.500000e-01 : f32
    %12 = vector.broadcast %cst_4 : f32 to vector<1x256xf32>
    %13 = arith.mulf %12, %11 : vector<1x256xf32>
    %14 = arith.addf %10, %13 : vector<1x256xf32>
    %c255_i32 = arith.constant 255 : i32
    %15 = tpu.dynamic_rotate %8 by %c255_i32 dim 1 : vector<1x256xf32>, i32 -> vector<1x256xf32>
    %cst_5 = arith.constant 1.500000e-01 : f32
    %16 = vector.broadcast %cst_5 : f32 to vector<1x256xf32>
    %17 = arith.mulf %16, %15 : vector<1x256xf32>
    %18 = arith.addf %14, %17 : vector<1x256xf32>
    %19 = tpu.iota {dimensions = array<i32: 1>} : vector<1x256xi32>
    %c0_i32 = arith.constant 0 : i32
    %20 = vector.broadcast %c0_i32 : i32 to vector<1x256xi32>
    %21 = arith.cmpi eq, %19, %20 : vector<1x256xi32>
    %c128_i32 = arith.constant 128 : i32
    %22 = vector.broadcast %c128_i32 : i32 to vector<1x256xi32>
    %23 = arith.cmpi eq, %19, %22 : vector<1x256xi32>
    %24 = arith.ori %21, %23 : vector<1x256xi1>
    %25 = arith.select %24, %8, %18 : vector<1x256xi1>, vector<1x256xf32>
    %cst_6 = arith.constant 0.000000e+00 : f32
    %26 = vector.broadcast %cst_6 : f32 to vector<1x256xf32>
    %27 = arith.cmpf ogt, %8, %26 : vector<1x256xf32>
    %cst_7 = arith.constant 1.000000e+00 : f32
    %28 = vector.broadcast %cst_7 : f32 to vector<1x256xf32>
    %29 = arith.select %27, %8, %28 : vector<1x256xi1>, vector<1x256xf32>
    %30 = tpu.reciprocal %29 : vector<1x256xf32> -> vector<1x256xf32>
    %31 = arith.mulf %25, %30 : vector<1x256xf32>
    %32 = arith.mulf %3, %31 : vector<1x256xf32>
    %33 = arith.select %27, %32, %25 : vector<1x256xi1>, vector<1x256xf32>
    %34 = arith.mulf %4, %31 : vector<1x256xf32>
    %cst_8 = arith.constant 0.000000e+00 : f32
    %35 = vector.broadcast %cst_8 : f32 to vector<1x256xf32>
    %36 = arith.select %27, %34, %35 : vector<1x256xi1>, vector<1x256xf32>
    %37 = tpu.concatenate %33, %36 in 1 : vector<1x256xf32>, vector<1x256xf32> -> vector<1x512xf32>
    %c0_9 = arith.constant 0 : index
    %c0_10 = arith.constant 0 : index
    %38 = vector.load %arg2[%c0_9, %c0_10] : memref<129x512xf32, #tpu.memory_space<vmem>>, vector<129x512xf32>
    %cst_11 = arith.constant dense<0.000000e+00> : vector<129x1xf32>
    %39 = tpu.matmul %38, %37, %cst_11 {dimension_numbers = #tpu.dot_dimension_numbers<[1], [1], [0], [0], [0, 0, 1, 0], [], []>} : vector<129x512xf32>, vector<1x512xf32>, vector<129x1xf32> -> vector<129x1xf32>
    %c0_12 = arith.constant 0 : index
    %c0_13 = arith.constant 0 : index
    %40 = vector.load %arg7[%c0_12, %c0_13] : memref<1x1024xf32, #tpu.memory_space<vmem>>, vector<1x32xf32>
    %c0_14 = arith.constant 0 : index
    %c128 = arith.constant 128 : index
    %41 = vector.load %arg7[%c0_14, %c128] : memref<1x1024xf32, #tpu.memory_space<vmem>>, vector<1x64xf32>
    %c0_15 = arith.constant 0 : index
    %c256 = arith.constant 256 : index
    %42 = vector.load %arg7[%c0_15, %c256] : memref<1x1024xf32, #tpu.memory_space<vmem>>, vector<1x128xf32>
    %cst_16 = arith.constant 0.000000e+00 : f32
    %43 = vector.broadcast %cst_16 : f32 to vector<133x1xf32>
    %c0_17 = arith.constant 0 : index
    %c0_18 = arith.constant 0 : index
    %44 = vector.load %arg9[%c0_17, %c0_18] : memref<133x1xf32, #tpu.memory_space<vmem>>, vector<133x1xf32>
    tpu.vector_store %arg9[%c0_17, %c0_18], %43 {strides = array<i32>} : memref<133x1xf32, #tpu.memory_space<vmem>>, vector<133x1xf32>,
    %c2 = arith.constant 2 : index
    %c0_19 = arith.constant 0 : index
    %45 = vector.load %arg9[%c2, %c0_19] : memref<133x1xf32, #tpu.memory_space<vmem>>, vector<129x1xf32>
    tpu.vector_store %arg9[%c2, %c0_19], %39 {strides = array<i32>} : memref<133x1xf32, #tpu.memory_space<vmem>>, vector<129x1xf32>,
    %c0_20 = arith.constant 0 : index
    %c0_21 = arith.constant 0 : index
    %46 = tpu.strided_load %arg9[%c0_20, %c0_21] {strides = array<i32: 2, 1>} : memref<133x1xf32, #tpu.memory_space<vmem>>, vector<65x1xf32>
    %c1 = arith.constant 1 : index
    %c0_22 = arith.constant 0 : index
    %47 = tpu.strided_load %arg9[%c1, %c0_22] {strides = array<i32: 2, 1>} : memref<133x1xf32, #tpu.memory_space<vmem>>, vector<65x1xf32>
    %c2_23 = arith.constant 2 : index
    %c0_24 = arith.constant 0 : index
    %48 = tpu.strided_load %arg9[%c2_23, %c0_24] {strides = array<i32: 2, 1>} : memref<133x1xf32, #tpu.memory_space<vmem>>, vector<65x1xf32>
    %c3 = arith.constant 3 : index
    %c0_25 = arith.constant 0 : index
    %49 = tpu.strided_load %arg9[%c3, %c0_25] {strides = array<i32: 2, 1>} : memref<133x1xf32, #tpu.memory_space<vmem>>, vector<65x1xf32>
    %c4 = arith.constant 4 : index
    %c0_26 = arith.constant 0 : index
    %50 = tpu.strided_load %arg9[%c4, %c0_26] {strides = array<i32: 2, 1>} : memref<133x1xf32, #tpu.memory_space<vmem>>, vector<65x1xf32>
    %cst_27 = arith.constant 0.000000e+00 : f32
    %51 = vector.broadcast %cst_27 : f32 to vector<65x32xf32>
    %c0_28 = arith.constant 0 : index
    %c0_29 = arith.constant 0 : index
    %52 = vector.load %arg3[%c0_28, %c0_29] : memref<5x32xf32, #tpu.memory_space<vmem>>, vector<1x32xf32>
    %53 = vector.broadcast %46 : vector<65x1xf32> to vector<65x32xf32>
    %54 = vector.broadcast %52 : vector<1x32xf32> to vector<65x32xf32>
    %55 = arith.mulf %53, %54 : vector<65x32xf32>
    %56 = arith.addf %51, %55 : vector<65x32xf32>
    %c1_30 = arith.constant 1 : index
    %c0_31 = arith.constant 0 : index
    %57 = vector.load %arg3[%c1_30, %c0_31] : memref<5x32xf32, #tpu.memory_space<vmem>>, vector<1x32xf32>
    %58 = vector.broadcast %47 : vector<65x1xf32> to vector<65x32xf32>
    %59 = vector.broadcast %57 : vector<1x32xf32> to vector<65x32xf32>
    %60 = arith.mulf %58, %59 : vector<65x32xf32>
    %61 = arith.addf %56, %60 : vector<65x32xf32>
    %c2_32 = arith.constant 2 : index
    %c0_33 = arith.constant 0 : index
    %62 = vector.load %arg3[%c2_32, %c0_33] : memref<5x32xf32, #tpu.memory_space<vmem>>, vector<1x32xf32>
    %63 = vector.broadcast %48 : vector<65x1xf32> to vector<65x32xf32>
    %64 = vector.broadcast %62 : vector<1x32xf32> to vector<65x32xf32>
    %65 = arith.mulf %63, %64 : vector<65x32xf32>
    %66 = arith.addf %61, %65 : vector<65x32xf32>
    %c3_34 = arith.constant 3 : index
    %c0_35 = arith.constant 0 : index
    %67 = vector.load %arg3[%c3_34, %c0_35] : memref<5x32xf32, #tpu.memory_space<vmem>>, vector<1x32xf32>
    %68 = vector.broadcast %49 : vector<65x1xf32> to vector<65x32xf32>
    %69 = vector.broadcast %67 : vector<1x32xf32> to vector<65x32xf32>
    %70 = arith.mulf %68, %69 : vector<65x32xf32>
    %71 = arith.addf %66, %70 : vector<65x32xf32>
    %c4_36 = arith.constant 4 : index
    %c0_37 = arith.constant 0 : index
    %72 = vector.load %arg3[%c4_36, %c0_37] : memref<5x32xf32, #tpu.memory_space<vmem>>, vector<1x32xf32>
    %73 = vector.broadcast %50 : vector<65x1xf32> to vector<65x32xf32>
    %74 = vector.broadcast %72 : vector<1x32xf32> to vector<65x32xf32>
    %75 = arith.mulf %73, %74 : vector<65x32xf32>
    %76 = arith.addf %71, %75 : vector<65x32xf32>
    %77 = vector.broadcast %40 : vector<1x32xf32> to vector<65x32xf32>
    %78 = arith.addf %76, %77 : vector<65x32xf32>
    %cst_38 = arith.constant 0.000000e+00 : f32
    %79 = vector.broadcast %cst_38 : f32 to vector<65x32xf32>
    %80 = arith.cmpf ogt, %78, %79 : vector<65x32xf32>
    %cst_39 = arith.constant 2.000000e-01 : f32
    %81 = vector.broadcast %cst_39 : f32 to vector<65x32xf32>
    %82 = arith.mulf %81, %78 : vector<65x32xf32>
    %83 = arith.select %80, %78, %82 : vector<65x32xi1>, vector<65x32xf32>
    %cst_40 = arith.constant 0.000000e+00 : f32
    %84 = vector.broadcast %cst_40 : f32 to vector<69x32xf32>
    %c0_41 = arith.constant 0 : index
    %c0_42 = arith.constant 0 : index
    %85 = vector.load %arg10[%c0_41, %c0_42] : memref<69x32xf32, #tpu.memory_space<vmem>>, vector<69x32xf32>
    tpu.vector_store %arg10[%c0_41, %c0_42], %84 {strides = array<i32>} : memref<69x32xf32, #tpu.memory_space<vmem>>, vector<69x32xf32>,
    %c2_43 = arith.constant 2 : index
    %c0_44 = arith.constant 0 : index
    %86 = vector.load %arg10[%c2_43, %c0_44] : memref<69x32xf32, #tpu.memory_space<vmem>>, vector<65x32xf32>
    tpu.vector_store %arg10[%c2_43, %c0_44], %83 {strides = array<i32>} : memref<69x32xf32, #tpu.memory_space<vmem>>, vector<65x32xf32>,
    %c0_45 = arith.constant 0 : index
    %c0_46 = arith.constant 0 : index
    %87 = tpu.strided_load %arg10[%c0_45, %c0_46] {strides = array<i32: 2, 1>} : memref<69x32xf32, #tpu.memory_space<vmem>>, vector<33x32xf32>
    %c1_47 = arith.constant 1 : index
    %c0_48 = arith.constant 0 : index
    %88 = tpu.strided_load %arg10[%c1_47, %c0_48] {strides = array<i32: 2, 1>} : memref<69x32xf32, #tpu.memory_space<vmem>>, vector<33x32xf32>
    %c2_49 = arith.constant 2 : index
    %c0_50 = arith.constant 0 : index
    %89 = tpu.strided_load %arg10[%c2_49, %c0_50] {strides = array<i32: 2, 1>} : memref<69x32xf32, #tpu.memory_space<vmem>>, vector<33x32xf32>
    %c3_51 = arith.constant 3 : index
    %c0_52 = arith.constant 0 : index
    %90 = tpu.strided_load %arg10[%c3_51, %c0_52] {strides = array<i32: 2, 1>} : memref<69x32xf32, #tpu.memory_space<vmem>>, vector<33x32xf32>
    %c4_53 = arith.constant 4 : index
    %c0_54 = arith.constant 0 : index
    %91 = tpu.strided_load %arg10[%c4_53, %c0_54] {strides = array<i32: 2, 1>} : memref<69x32xf32, #tpu.memory_space<vmem>>, vector<33x32xf32>
    %92 = tpu.concatenate %87, %88, %89, %90, %91 in 1 : vector<33x32xf32>, vector<33x32xf32>, vector<33x32xf32>, vector<33x32xf32>, vector<33x32xf32> -> vector<33x160xf32>
    %c0_55 = arith.constant 0 : index
    %c0_56 = arith.constant 0 : index
    %93 = vector.load %arg4[%c0_55, %c0_56] : memref<160x64xf32, #tpu.memory_space<vmem>>, vector<160x64xf32>
    %cst_57 = arith.constant dense<0.000000e+00> : vector<33x64xf32>
    %94 = tpu.matmul %92, %93, %cst_57 {dimension_numbers = #tpu.dot_dimension_numbers<[1], [0], [0], [1], [0, 0, 1, 1], [], []>} : vector<33x160xf32>, vector<160x64xf32>, vector<33x64xf32> -> vector<33x64xf32>
    %95 = vector.broadcast %41 : vector<1x64xf32> to vector<33x64xf32>
    %96 = arith.addf %94, %95 : vector<33x64xf32>
    %cst_58 = arith.constant 0.000000e+00 : f32
    %97 = vector.broadcast %cst_58 : f32 to vector<33x64xf32>
    %98 = arith.cmpf ogt, %96, %97 : vector<33x64xf32>
    %cst_59 = arith.constant 2.000000e-01 : f32
    %99 = vector.broadcast %cst_59 : f32 to vector<33x64xf32>
    %100 = arith.mulf %99, %96 : vector<33x64xf32>
    %101 = arith.select %98, %96, %100 : vector<33x64xi1>, vector<33x64xf32>
    %cst_60 = arith.constant 0.000000e+00 : f32
    %102 = vector.broadcast %cst_60 : f32 to vector<37x64xf32>
    %c0_61 = arith.constant 0 : index
    %c0_62 = arith.constant 0 : index
    %103 = vector.load %arg11[%c0_61, %c0_62] : memref<37x64xf32, #tpu.memory_space<vmem>>, vector<37x64xf32>
    tpu.vector_store %arg11[%c0_61, %c0_62], %102 {strides = array<i32>} : memref<37x64xf32, #tpu.memory_space<vmem>>, vector<37x64xf32>,
    %c2_63 = arith.constant 2 : index
    %c0_64 = arith.constant 0 : index
    %104 = vector.load %arg11[%c2_63, %c0_64] : memref<37x64xf32, #tpu.memory_space<vmem>>, vector<33x64xf32>
    tpu.vector_store %arg11[%c2_63, %c0_64], %101 {strides = array<i32>} : memref<37x64xf32, #tpu.memory_space<vmem>>, vector<33x64xf32>,
    %c0_65 = arith.constant 0 : index
    %c0_66 = arith.constant 0 : index
    %105 = tpu.strided_load %arg11[%c0_65, %c0_66] {strides = array<i32: 2, 1>} : memref<37x64xf32, #tpu.memory_space<vmem>>, vector<17x64xf32>
    %c1_67 = arith.constant 1 : index
    %c0_68 = arith.constant 0 : index
    %106 = tpu.strided_load %arg11[%c1_67, %c0_68] {strides = array<i32: 2, 1>} : memref<37x64xf32, #tpu.memory_space<vmem>>, vector<17x64xf32>
    %c2_69 = arith.constant 2 : index
    %c0_70 = arith.constant 0 : index
    %107 = tpu.strided_load %arg11[%c2_69, %c0_70] {strides = array<i32: 2, 1>} : memref<37x64xf32, #tpu.memory_space<vmem>>, vector<17x64xf32>
    %c3_71 = arith.constant 3 : index
    %c0_72 = arith.constant 0 : index
    %108 = tpu.strided_load %arg11[%c3_71, %c0_72] {strides = array<i32: 2, 1>} : memref<37x64xf32, #tpu.memory_space<vmem>>, vector<17x64xf32>
    %c4_73 = arith.constant 4 : index
    %c0_74 = arith.constant 0 : index
    %109 = tpu.strided_load %arg11[%c4_73, %c0_74] {strides = array<i32: 2, 1>} : memref<37x64xf32, #tpu.memory_space<vmem>>, vector<17x64xf32>
    %110 = tpu.concatenate %105, %106, %107, %108, %109 in 1 : vector<17x64xf32>, vector<17x64xf32>, vector<17x64xf32>, vector<17x64xf32>, vector<17x64xf32> -> vector<17x320xf32>
    %c0_75 = arith.constant 0 : index
    %c0_76 = arith.constant 0 : index
    %111 = vector.load %arg5[%c0_75, %c0_76] : memref<320x128xf32, #tpu.memory_space<vmem>>, vector<320x128xf32>
    %cst_77 = arith.constant dense<0.000000e+00> : vector<17x128xf32>
    %112 = tpu.matmul %110, %111, %cst_77 {dimension_numbers = #tpu.dot_dimension_numbers<[1], [0], [0], [1], [0, 0, 1, 1], [], []>} : vector<17x320xf32>, vector<320x128xf32>, vector<17x128xf32> -> vector<17x128xf32>
    %113 = vector.broadcast %42 : vector<1x128xf32> to vector<17x128xf32>
    %114 = arith.addf %112, %113 : vector<17x128xf32>
    %cst_78 = arith.constant 0.000000e+00 : f32
    %115 = vector.broadcast %cst_78 : f32 to vector<17x128xf32>
    %116 = arith.cmpf ogt, %114, %115 : vector<17x128xf32>
    %cst_79 = arith.constant 2.000000e-01 : f32
    %117 = vector.broadcast %cst_79 : f32 to vector<17x128xf32>
    %118 = arith.mulf %117, %114 : vector<17x128xf32>
    %119 = arith.select %116, %114, %118 : vector<17x128xi1>, vector<17x128xf32>
    %cst_80 = arith.constant dense<0.000000e+00> : vector<128xf32>
    %120 = vector.multi_reduction <add>, %119, %cst_80 [0] : vector<17x128xf32> to vector<128xf32>
    %121 = vector.shape_cast %120 : vector<128xf32> to vector<1x128xf32>
    %cst_81 = arith.constant 1.700000e+01 : f32
    %122 = vector.broadcast %cst_81 : f32 to vector<1x128xf32>
    %123 = arith.divf %121, %122 : vector<1x128xf32>
    %c0_82 = arith.constant 0 : index
    %c384 = arith.constant 384 : index
    %124 = vector.load %arg7[%c0_82, %c384] : memref<1x1024xf32, #tpu.memory_space<vmem>>, vector<1x256xf32>
    %c0_83 = arith.constant 0 : index
    %c640 = arith.constant 640 : index
    %125 = vector.load %arg7[%c0_83, %c640] : memref<1x1024xf32, #tpu.memory_space<vmem>>, vector<1x256xf32>
    %c0_84 = arith.constant 0 : index
    %c896 = arith.constant 896 : index
    %126 = vector.load %arg7[%c0_84, %c896] : memref<1x1024xf32, #tpu.memory_space<vmem>>, vector<1x1xf32>
    %c0_85 = arith.constant 0 : index
    %c0_86 = arith.constant 0 : index
    %127 = vector.load %arg6[%c0_85, %c0_86] : memref<128x256xf32, #tpu.memory_space<vmem>>, vector<128x256xf32>
    %cst_87 = arith.constant dense<0.000000e+00> : vector<1x256xf32>
    %128 = tpu.matmul %123, %127, %cst_87 {dimension_numbers = #tpu.dot_dimension_numbers<[1], [0], [0], [1], [0, 0, 1, 1], [], []>} : vector<1x128xf32>, vector<128x256xf32>, vector<1x256xf32> -> vector<1x256xf32>
    %129 = arith.addf %128, %124 : vector<1x256xf32>
    %cst_88 = arith.constant 0.000000e+00 : f32
    %130 = vector.broadcast %cst_88 : f32 to vector<1x256xf32>
    %131 = arith.cmpf ogt, %129, %130 : vector<1x256xf32>
    %cst_89 = arith.constant 2.000000e-01 : f32
    %132 = vector.broadcast %cst_89 : f32 to vector<1x256xf32>
    %133 = arith.mulf %132, %129 : vector<1x256xf32>
    %134 = arith.select %131, %129, %133 : vector<1x256xi1>, vector<1x256xf32>
    %135 = arith.mulf %134, %125 : vector<1x256xf32>
    %cst_90 = arith.constant dense<0.000000e+00> : vector<1xf32>
    %136 = vector.multi_reduction <add>, %135, %cst_90 [1] : vector<1x256xf32> to vector<1xf32>
    %137 = vector.shape_cast %136 : vector<1xf32> to vector<1x1xf32>
    %138 = arith.addf %137, %126 : vector<1x1xf32>
    %c0_91 = arith.constant 0 : index
    %c0_92 = arith.constant 0 : index
    %139 = vector.load %arg8[%c0_91, %c0_92] : memref<1x1xf32, #tpu.memory_space<vmem>>, vector<1x1xf32>
    tpu.vector_store %arg8[%c0_91, %c0_92], %138 {strides = array<i32>} : memref<1x1xf32, #tpu.memory_space<vmem>>, vector<1x1xf32>,
    return
  }
}

</mosaic_0001>

<llo_original>
// kernel: custom-call
$region0: #{custom-call}
  %s0 = inlined_call_operand.vmem [shape: f32[1024], index: 0, kind: output, shape index: {}]

// kernel: instrument_enhanced_generator_forward.1
$region0: #{instrument_enhanced_generator_forward.1}
  #allocation0 [shape = 'u32[]', space=smem, size = 0x4, offset = 0x4, fixed_abs, tag = 'smem constant byte address 0x4 - core index']
  #allocation1 [shape = 'u32[144,128]{1,0:T(1,128)}', space=vmem, size = 0x12000, scoped, tag = 'internal scratch']
  #allocation2 [shape = 'f32[133,1]{1,0:T(8,128)}', space=vmem, size = 0x11000, scoped, tag = 'scratch operand']
  #allocation3 [shape = 'f32[69,32]{1,0:T(8,128)}', space=vmem, size = 0x9000, scoped, tag = 'scratch operand']
  #allocation4 [shape = 'f32[37,64]{1,0:T(8,128)}', space=vmem, size = 0x5000, scoped, tag = 'scratch operand']
  %s0 = inlined_call_operand.vmem [shape: f32[1,129], index: 0, kind: input, shape index: {}]
  %s1 = inlined_call_operand.hbm [shape: f32[129,512], index: 1, kind: input, shape index: {}]
  %s2 = inlined_call_operand.vmem [shape: f32[129,512], index: 2, kind: input, shape index: {}]
  %s3 = inlined_call_operand.vmem [shape: f32[5,32], index: 3, kind: input, shape index: {}]
  %s4 = inlined_call_operand.hbm [shape: f32[160,64], index: 4, kind: input, shape index: {}]
  %s5 = inlined_call_operand.hbm [shape: f32[320,128], index: 5, kind: input, shape index: {}]
  %s6 = inlined_call_operand.vmem [shape: f32[128,256], index: 6, kind: input, shape index: {}]
  %s7 = inlined_call_operand.vmem [shape: f32[1,1024], index: 7, kind: input, shape index: {}]
  %s8 = inlined_call_operand.hbm [shape: f32[1,1], index: 8, kind: output, shape index: {}]
  %s9 = sld [smem:[#allocation0]]
  $region54: #{instrument_enhanced_generator_forward.1} parent=0
    _
  %s11 = ssub.s32 1, %s9
  %s12 = scalar_select 0, %s11, %s9
  $region1: #{instrument_enhanced_generator_forward.1} parent=0
    #allocation5 [shape = 'u8[278528]{0}', space=vmem, size = 0x44000, scoped, tag = 'input window, operand 1, single buffered']
    #allocation6 [shape = 's32[1]{0}', space=sflag, size = 0x4, scoped, tag = 'scoped memory for instrument_enhanced_generator_forward.1']
    #allocation7 [shape = 's32[1]{0}', space=sflag, size = 0x4, scoped, tag = 'scoped memory for instrument_enhanced_generator_forward.1']
    #allocation8 [shape = 'u8[81920]{0}', space=vmem, size = 0x14000, scoped, tag = 'input window, operand 4, single buffered']
    #allocation9 [shape = 's32[1]{0}', space=sflag, size = 0x4, scoped, tag = 'scoped memory for instrument_enhanced_generator_forward.1']
    #allocation10 [shape = 'u8[163840]{0}', space=vmem, size = 0x28000, scoped, tag = 'input window, operand 5, single buffered']
    #allocation11 [shape = 'u8[512]{0}', space=vmem, size = 0x400, scoped, tag = 'output window, operand 0, single buffered']
    %13 = vsyncpa [#allocation6], 0
    %14 = vsyncpa [#allocation9], 0
    %15 = vsyncpa [#allocation7], 0
    // Predicated region
    $region2: #{instrument_enhanced_generator_forward.1} parent=1 // pred_check
      _
    $region3: #{instrument_enhanced_generator_forward.1} parent=1 // pred_check_branch
      %17 = sbr.rel (0) target = $region5
    $region4: #{instrument_enhanced_generator_forward.1} parent=1 // pred_region
      _
    $region5: #{instrument_enhanced_generator_forward.1} parent=1 // pred_fallthru
      _
    // Predicated region
    $region6: #{instrument_enhanced_generator_forward.1} parent=1 // pred_check
      _
    $region7: #{instrument_enhanced_generator_forward.1} parent=1 // pred_check_branch
      %19 = sbr.rel (0) target = $region9
    $region8: #{instrument_enhanced_generator_forward.1} parent=1 // pred_region
      %s21 = ssub.s32 8704, 8704
      %22 = vsyncadd [#allocation6], %s21
      %s23 = sshll.u32 [#allocation5], 4
      %s24 = int_to_ptr.vmem [resolvable:$true] %s23
      %29 = dma.hbm_to_vmem [thread:$0]  %s1, 8704, %s24, [#allocation6], 512, 512, 32
    $region9: #{instrument_enhanced_generator_forward.1} parent=1 // pred_fallthru
      _
    // Predicated region
    $region10: #{instrument_enhanced_generator_forward.1} parent=1 // pred_check
      _
    $region11: #{instrument_enhanced_generator_forward.1} parent=1 // pred_check_branch
      %31 = sbr.rel (0) target = $region13
    $region12: #{instrument_enhanced_generator_forward.1} parent=1 // pred_region
      _
    $region13: #{instrument_enhanced_generator_forward.1} parent=1 // pred_fallthru
      _
    // Predicated region
    $region14: #{instrument_enhanced_generator_forward.1} parent=1 // pred_check
      _
    $region15: #{instrument_enhanced_generator_forward.1} parent=1 // pred_check_branch
      %33 = sbr.rel (0) target = $region17
    $region16: #{instrument_enhanced_generator_forward.1} parent=1 // pred_region
      _
    $region17: #{instrument_enhanced_generator_forward.1} parent=1 // pred_fallthru
      _
    // Predicated region
    $region18: #{instrument_enhanced_generator_forward.1} parent=1 // pred_check
      _
    $region19: #{instrument_enhanced_generator_forward.1} parent=1 // pred_check_branch
      %35 = sbr.rel (0) target = $region21
    $region20: #{instrument_enhanced_generator_forward.1} parent=1 // pred_region
      %s37 = ssub.s32 2560, 2560
      %38 = vsyncadd [#allocation9], %s37
      %s39 = sshll.u32 [#allocation8], 4
      %s40 = int_to_ptr.vmem [resolvable:$true] %s39
      %45 = dma.hbm_to_vmem [thread:$0]  %s4, 2560, %s40, [#allocation9], 128, 128, 8
    $region21: #{instrument_enhanced_generator_forward.1} parent=1 // pred_fallthru
      _
    // Predicated region
    $region22: #{instrument_enhanced_generator_forward.1} parent=1 // pred_check
      _
    $region23: #{instrument_enhanced_generator_forward.1} parent=1 // pred_check_branch
      %47 = sbr.rel (0) target = $region25
    $region24: #{instrument_enhanced_generator_forward.1} parent=1 // pred_region
      %s49 = ssub.s32 5120, 5120
      %50 = vsyncadd [#allocation9], %s49
      %s51 = sshll.u32 [#allocation10], 4
      %s52 = int_to_ptr.vmem [resolvable:$true] %s51
      %57 = dma.hbm_to_vmem [thread:$0]  %s5, 5120, %s52, [#allocation9], 128, 128, 8
    $region25: #{instrument_enhanced_generator_forward.1} parent=1 // pred_fallthru
      _
    // Predicated region
    $region26: #{instrument_enhanced_generator_forward.1} parent=1 // pred_check
      _
    $region27: #{instrument_enhanced_generator_forward.1} parent=1 // pred_check_branch
      %59 = sbr.rel (0) target = $region29
    $region28: #{instrument_enhanced_generator_forward.1} parent=1 // pred_region
      _
    $region29: #{instrument_enhanced_generator_forward.1} parent=1 // pred_fallthru
      _
    // Predicated region
    $region30: #{instrument_enhanced_generator_forward.1} parent=1 // pred_check
      _
    $region31: #{instrument_enhanced_generator_forward.1} parent=1 // pred_check_branch
      %61 = sbr.rel (0) target = $region33
    $region32: #{instrument_enhanced_generator_forward.1} parent=1 // pred_region
      _
    $region33: #{instrument_enhanced_generator_forward.1} parent=1 // pred_fallthru
      _
    // Predicated region
    $region34: #{instrument_enhanced_generator_forward.1} parent=1 // pred_check
      _
    $region35: #{instrument_enhanced_generator_forward.1} parent=1 // pred_check_branch
      %63 = sbr.rel (0) target = $region37
    $region36: #{instrument_enhanced_generator_forward.1} parent=1 // pred_region
      %64 = dma.done [#allocation6], 8704
    $region37: #{instrument_enhanced_generator_forward.1} parent=1 // pred_fallthru
      _
    // Predicated region
    $region38: #{instrument_enhanced_generator_forward.1} parent=1 // pred_check
      _
    $region39: #{instrument_enhanced_generator_forward.1} parent=1 // pred_check_branch
      %66 = sbr.rel (0) target = $region41
    $region40: #{instrument_enhanced_generator_forward.1} parent=1 // pred_region
      %67 = dma.done [#allocation9], 2560
    $region41: #{instrument_enhanced_generator_forward.1} parent=1 // pred_fallthru
      _
    // Predicated region
    $region42: #{instrument_enhanced_generator_forward.1} parent=1 // pred_check
      _
    $region43: #{instrument_enhanced_generator_forward.1} parent=1 // pred_check_branch
      %69 = sbr.rel (0) target = $region45
    $region44: #{instrument_enhanced_generator_forward.1} parent=1 // pred_region
      %70 = dma.done [#allocation9], 5120
    $region45: #{instrument_enhanced_generator_forward.1} parent=1 // pred_fallthru
      _
    %v71 = vld [vmem:[%s0] sm:$0x3]
    %v72 = vld [vmem:[#allocation5] sm:$0xff]
    %v73 = vld [vmem:[#allocation5 + $0x8] sm:$0xff]
    %v74 = vld [vmem:[#allocation5 + $0x10] sm:$0xff]
    %v75 = vld [vmem:[#allocation5 + $0x18] sm:$0xff]
    %v76 = vld [vmem:[#allocation5 + $0x20] sm:$0xff]
    %v77 = vld [vmem:[#allocation5 + $0x28] sm:$0xff]
    %v78 = vld [vmem:[#allocation5 + $0x30] sm:$0xff]
    %v79 = vld [vmem:[#allocation5 + $0x38] sm:$0xff]
    %v80 = vld [vmem:[#allocation5 + $0x40] sm:$0xff]
    %v81 = vld [vmem:[#allocation5 + $0x48] sm:$0xff]
    %v82 = vld [vmem:[#allocation5 + $0x50] sm:$0xff]
    %v83 = vld [vmem:[#allocation5 + $0x58] sm:$0xff]
    %v84 = vld [vmem:[#allocation5 + $0x60] sm:$0xff]
    %v85 = vld [vmem:[#allocation5 + $0x68] sm:$0xff]
    %v86 = vld [vmem:[#allocation5 + $0x70] sm:$0xff]
    %v87 = vld [vmem:[#allocation5 + $0x78] sm:$0xff]
    %v88 = vld [vmem:[#allocation5 + $0x80] sm:$0xff]
    %v89 = vld [vmem:[#allocation5 + $0x88] sm:$0xff]
    %v90 = vld [vmem:[#allocation5 + $0x90] sm:$0xff]
    %v91 = vld [vmem:[#allocation5 + $0x98] sm:$0xff]
    %v92 = vld [vmem:[#allocation5 + $0xa0] sm:$0xff]
    %v93 = vld [vmem:[#allocation5 + $0xa8] sm:$0xff]
    %v94 = vld [vmem:[#allocation5 + $0xb0] sm:$0xff]
    %v95 = vld [vmem:[#allocation5 + $0xb8] sm:$0xff]
    %v96 = vld [vmem:[#allocation5 + $0xc0] sm:$0xff]
    %v97 = vld [vmem:[#allocation5 + $0xc8] sm:$0xff]
    %v98 = vld [vmem:[#allocation5 + $0xd0] sm:$0xff]
    %v99 = vld [vmem:[#allocation5 + $0xd8] sm:$0xff]
    %v100 = vld [vmem:[#allocation5 + $0xe0] sm:$0xff]
    %v101 = vld [vmem:[#allocation5 + $0xe8] sm:$0xff]
    %v102 = vld [vmem:[#allocation5 + $0xf0] sm:$0xff]
    %v103 = vld [vmem:[#allocation5 + $0xf8] sm:$0xff]
    %v104 = vld [vmem:[#allocation5 + $0x100] sm:$0xff]
    %v105 = vld [vmem:[#allocation5 + $0x108] sm:$0xff]
    %v106 = vld [vmem:[#allocation5 + $0x110] sm:$0xff]
    %v107 = vld [vmem:[#allocation5 + $0x118] sm:$0xff]
    %v108 = vld [vmem:[#allocation5 + $0x120] sm:$0xff]
    %v109 = vld [vmem:[#allocation5 + $0x128] sm:$0xff]
    %v110 = vld [vmem:[#allocation5 + $0x130] sm:$0xff]
    %v111 = vld [vmem:[#allocation5 + $0x138] sm:$0xff]
    %v112 = vld [vmem:[#allocation5 + $0x140] sm:$0xff]
    %v113 = vld [vmem:[#allocation5 + $0x148] sm:$0xff]
    %v114 = vld [vmem:[#allocation5 + $0x150] sm:$0xff]
    %v115 = vld [vmem:[#allocation5 + $0x158] sm:$0xff]
    %v116 = vld [vmem:[#allocation5 + $0x160] sm:$0xff]
    %v117 = vld [vmem:[#allocation5 + $0x168] sm:$0xff]
    %v118 = vld [vmem:[#allocation5 + $0x170] sm:$0xff]
    %v119 = vld [vmem:[#allocation5 + $0x178] sm:$0xff]
    %v120 = vld [vmem:[#allocation5 + $0x180] sm:$0xff]
    %v121 = vld [vmem:[#allocation5 + $0x188] sm:$0xff]
    %v122 = vld [vmem:[#allocation5 + $0x190] sm:$0xff]
    %v123 = vld [vmem:[#allocation5 + $0x198] sm:$0xff]
    %v124 = vld [vmem:[#allocation5 + $0x1a0] sm:$0xff]
    %v125 = vld [vmem:[#allocation5 + $0x1a8] sm:$0xff]
    %v126 = vld [vmem:[#allocation5 + $0x1b0] sm:$0xff]
    %v127 = vld [vmem:[#allocation5 + $0x1b8] sm:$0xff]
    %v128 = vld [vmem:[#allocation5 + $0x1c0] sm:$0xff]
    %v129 = vld [vmem:[#allocation5 + $0x1c8] sm:$0xff]
    %v130 = vld [vmem:[#allocation5 + $0x1d0] sm:$0xff]
    %v131 = vld [vmem:[#allocation5 + $0x1d8] sm:$0xff]
    %v132 = vld [vmem:[#allocation5 + $0x1e0] sm:$0xff]
    %v133 = vld [vmem:[#allocation5 + $0x1e8] sm:$0xff]
    %v134 = vld [vmem:[#allocation5 + $0x1f0] sm:$0xff]
    %v135 = vld [vmem:[#allocation5 + $0x1f8] sm:$0xff]
    %v136 = vld [vmem:[#allocation5 + $0x200] sm:$0x1]
    %v137 = vld [vmem:[#allocation5 + $0x208] sm:$0x1]
    %v138 = vld [vmem:[#allocation5 + $0x210] sm:$0x1]
    %v139 = vld [vmem:[#allocation5 + $0x218] sm:$0x1]
    %v141 = vlaneseq
    %v142 = vshrl.u32 %v141, 7
    %v143 = vsub.s32 0, %v142
    %v144 = vrot.slane %v71, %v143
    %v145 = vlaneseq
    %v146 = vshrl.u32 %v145, 7
    %v147 = vsub.s32 1, %v146
    %v148 = vrot.slane %v71, %v147
    %vm150 = vcmask 7168
    %v151 = vsel %vm150, %v148, 0
    %vm153 = vcmask 1040384
    %v155 = vsel %vm153, %v136, 0
    %v158 = vsel %vm153, %v137, 0
    %v161 = vsel %vm153, %v138, 0
    %v164 = vsel %vm153, %v139, 0
    %166 = vmatprep.subr.mxu0 %v73
    %167 = vmatpush1.msra.mxu0 %v72
    %168 = vmatprep.subr.mxu0 %v77
    %169 = vmatpush1.msra.mxu0 %v76
    %170 = vmatprep.subr.mxu0 %v81
    %171 = vmatpush1.msra.mxu0 %v80
    %172 = vmatprep.subr.mxu0 %v85
    %173 = vmatpush1.msra.mxu0 %v84
    %174 = vmatprep.subr.mxu0 %v89
    %175 = vmatpush1.msra.mxu0 %v88
    %176 = vmatprep.subr.mxu0 %v93
    %177 = vmatpush1.msra.mxu0 %v92
    %178 = vmatprep.subr.mxu0 %v97
    %179 = vmatpush1.msra.mxu0 %v96
    %180 = vmatprep.subr.mxu0 %v101
    %181 = vmatpush1.msra.mxu0 %v100
    %182 = vmatprep.subr.mxu0 %v105
    %183 = vmatpush1.msra.mxu0 %v104
    %184 = vmatprep.subr.mxu0 %v109
    %185 = vmatpush1.msra.mxu0 %v108
    %186 = vmatprep.subr.mxu0 %v113
    %187 = vmatpush1.msra.mxu0 %v112
    %188 = vmatprep.subr.mxu0 %v117
    %189 = vmatpush1.msra.mxu0 %v116
    %190 = vmatprep.subr.mxu0 %v121
    %191 = vmatpush1.msra.mxu0 %v120
    %192 = vmatprep.subr.mxu0 %v125
    %193 = vmatpush1.msra.mxu0 %v124
    %194 = vmatprep.subr.mxu0 %v129
    %195 = vmatpush1.msra.mxu0 %v128
    %196 = vmatprep.subr.mxu0 %v133
    %197 = vmatpush1.msra.mxu0 %v132
    %198 = vmatprep.subr.mxu0 %v158
    %199 = vmatpush1.msra.mxu0 %v155
    %200 = vmatprep.subr.mxu0 0.0
    %201 = vmatpush1.msra.mxu0 0.0
    %202 = vmatprep.subr.mxu0 0.0
    %203 = vmatpush1.msra.mxu0 0.0
    %204 = vmatprep.subr.mxu0 0.0
    %205 = vmatpush1.msra.mxu0 0.0
    %206 = vmatprep.subr.mxu0 0.0
    %207 = vmatpush1.msra.mxu0 0.0
    %208 = vmatprep.subr.mxu0 0.0
    %209 = vmatpush1.msra.mxu0 0.0
    %210 = vmatprep.subr.mxu0 0.0
    %211 = vmatpush1.msra.mxu0 0.0
    %212 = vmatprep.subr.mxu0 0.0
    %213 = vmatpush1.msra.mxu0 0.0
    %214 = vmatprep.subr.mxu0 0.0
    %215 = vmatpush1.msra.mxu0 0.0
    %216 = vmatprep.subr.mxu0 0.0
    %217 = vmatpush1.msra.mxu0 0.0
    %218 = vmatprep.subr.mxu0 0.0
    %219 = vmatpush1.msra.mxu0 0.0
    %220 = vmatprep.subr.mxu0 0.0
    %221 = vmatpush1.msra.mxu0 0.0
    %222 = vmatprep.subr.mxu0 0.0
    %223 = vmatpush1.msra.mxu0 0.0
    %224 = vmatprep.subr.mxu0 0.0
    %225 = vmatpush1.msra.mxu0 0.0
    %226 = vmatprep.subr.mxu0 0.0
    %227 = vmatpush1.msra.mxu0 0.0
    %228 = vmatprep.subr.mxu0 0.0
    %229 = vmatpush1.msra.mxu0 0.0
    %230 = vmatprep.mubr.f32.mxu0 %v151
    %231 = vmatmul.mubr.f32.gmra.mrb[0].mxu0 %v144
    %v232 = vpop.f32.mrb[0].mxu0
    %v233 = vadd.f32 0.0, %v232
    %v234 = vpop.f32.mrb[0].mxu0
    %v235 = vadd.f32 0.0, %v234
    %236 = vdwg.mxu0
    %237 = vmatprep.subr.mxu0 %v75
    %238 = vmatpush1.msra.mxu0 %v74
    %239 = vmatprep.subr.mxu0 %v79
    %240 = vmatpush1.msra.mxu0 %v78
    %241 = vmatprep.subr.mxu0 %v83
    %242 = vmatpush1.msra.mxu0 %v82
    %243 = vmatprep.subr.mxu0 %v87
    %244 = vmatpush1.msra.mxu0 %v86
    %245 = vmatprep.subr.mxu0 %v91
    %246 = vmatpush1.msra.mxu0 %v90
    %247 = vmatprep.subr.mxu0 %v95
    %248 = vmatpush1.msra.mxu0 %v94
    %249 = vmatprep.subr.mxu0 %v99
    %250 = vmatpush1.msra.mxu0 %v98
    %251 = vmatprep.subr.mxu0 %v103
    %252 = vmatpush1.msra.mxu0 %v102
    %253 = vmatprep.subr.mxu0 %v107
    %254 = vmatpush1.msra.mxu0 %v106
    %255 = vmatprep.subr.mxu0 %v111
    %256 = vmatpush1.msra.mxu0 %v110
    %257 = vmatprep.subr.mxu0 %v115
    %258 = vmatpush1.msra.mxu0 %v114
    %259 = vmatprep.subr.mxu0 %v119
    %260 = vmatpush1.msra.mxu0 %v118
    %261 = vmatprep.subr.mxu0 %v123
    %262 = vmatpush1.msra.mxu0 %v122
    %263 = vmatprep.subr.mxu0 %v127
    %264 = vmatpush1.msra.mxu0 %v126
    %265 = vmatprep.subr.mxu0 %v131
    %266 = vmatpush1.msra.mxu0 %v130
    %267 = vmatprep.subr.mxu0 %v135
    %268 = vmatpush1.msra.mxu0 %v134
    %269 = vmatprep.subr.mxu0 %v164
    %270 = vmatpush1.msra.mxu0 %v161
    %271 = vmatprep.subr.mxu0 0.0
    %272 = vmatpush1.msra.mxu0 0.0
    %273 = vmatprep.subr.mxu0 0.0
    %274 = vmatpush1.msra.mxu0 0.0
    %275 = vmatprep.subr.mxu0 0.0
    %276 = vmatpush1.msra.mxu0 0.0
    %277 = vmatprep.subr.mxu0 0.0
    %278 = vmatpush1.msra.mxu0 0.0
    %279 = vmatprep.subr.mxu0 0.0
    %280 = vmatpush1.msra.mxu0 0.0
    %281 = vmatprep.subr.mxu0 0.0
    %282 = vmatpush1.msra.mxu0 0.0
    %283 = vmatprep.subr.mxu0 0.0
    %284 = vmatpush1.msra.mxu0 0.0
    %285 = vmatprep.subr.mxu0 0.0
    %286 = vmatpush1.msra.mxu0 0.0
    %287 = vmatprep.subr.mxu0 0.0
    %288 = vmatpush1.msra.mxu0 0.0
    %289 = vmatprep.subr.mxu0 0.0
    %290 = vmatpush1.msra.mxu0 0.0
    %291 = vmatprep.subr.mxu0 0.0
    %292 = vmatpush1.msra.mxu0 0.0
    %293 = vmatprep.subr.mxu0 0.0
    %294 = vmatpush1.msra.mxu0 0.0
    %295 = vmatprep.subr.mxu0 0.0
    %296 = vmatpush1.msra.mxu0 0.0
    %297 = vmatprep.subr.mxu0 0.0
    %298 = vmatpush1.msra.mxu0 0.0
    %299 = vmatprep.subr.mxu0 0.0
    %300 = vmatpush1.msra.mxu0 0.0
    %301 = vmatprep.mubr.f32.mxu0 %v151
    %302 = vmatmul.mubr.f32.gmra.mrb[0].mxu0 %v144
    %v303 = vpop.f32.mrb[0].mxu0
    %v304 = vadd.f32 0.0, %v303
    %v305 = vpop.f32.mrb[0].mxu0
    %v306 = vadd.f32 0.0, %v305
    %307 = vdwg.mxu0
    %v308 = vmul.f32 %v233, %v233
    %v309 = vmul.f32 %v235, %v235
    %v310 = vmul.f32 %v304, %v304
    %v311 = vmul.f32 %v306, %v306
    %v312 = vadd.f32 %v308, %v310
    %v313 = vadd.f32 %v309, %v311
    %v314 = vrsqrt.pop %v312
    %v315 = vmul.f32 %v312, %v314
    %vm316 = vcmp.eq.f32.partialorder %v312, inf
    %v317 = vsel %vm316, %v312, %v315
    %vm318 = vcmp.eq.f32.partialorder %v312, 0.0
    %v319 = vand.u32 %v312, 2147483648
    %v320 = vsel %vm318, %v319, %v317
    %v321 = vrsqrt.pop %v313
    %v322 = vmul.f32 %v313, %v321
    %vm323 = vcmp.eq.f32.partialorder %v313, inf
    %v324 = vsel %vm323, %v313, %v322
    %vm325 = vcmp.eq.f32.partialorder %v313, 0.0
    %v326 = vand.u32 %v313, 2147483648
    %v327 = vsel %vm325, %v326, %v324
    %v328 = vmul.f32 %v320, 0.7
    %v329 = vmul.f32 %v327, 0.7
    %330 = vrot.lane.b32.xlu0 %v320, 1
    %v331 = vpop.permute.xlu0 %330
    %332 = vrot.lane.b32.xlu0 %v327, 1
    %v333 = vpop.permute.xlu0 %332
    %v334 = vlaneseq
    %v335 = vand.u32 %v334, 127
    %vm336 = vcmp.lt.s32.totalorder %v335, 1
    %v337 = vsel %vm336, %v331, %v333
    %v338 = vsel %vm336, %v333, %v331
    %v339 = vmul.f32 %v338, 0.15
    %v340 = vmul.f32 %v337, 0.15
    %v341 = vadd.f32 %v328, %v339
    %v342 = vadd.f32 %v329, %v340
    %343 = vrot.lane.b32.xlu0 %v320, 127
    %v344 = vpop.permute.xlu0 %343
    %345 = vrot.lane.b32.xlu0 %v327, 127
    %v346 = vpop.permute.xlu0 %345
    %vm347 = vcmp.lt.s32.totalorder %v335, 127
    %v348 = vsel %vm347, %v344, %v346
    %v349 = vsel %vm347, %v346, %v344
    %v350 = vmul.f32 %v348, 0.15
    %v351 = vmul.f32 %v349, 0.15
    %v352 = vadd.f32 %v341, %v350
    %v353 = vadd.f32 %v342, %v351
    %v354 = vadd.s32 %v335, 128
    %vm355 = vcmp.eq.s32.totalorder %v335, 0
    %vm356 = vcmp.eq.s32.totalorder %v354, 0
    %vm357 = vcmp.eq.s32.totalorder %v335, 128
    %vm358 = vcmp.eq.s32.totalorder %v354, 128
    %vm359 = vmor %vm355, %vm357
    %vm360 = vmor %vm356, %vm358
    %v361 = vsel %vm359, %v320, %v352
    %v362 = vsel %vm360, %v327, %v353
    %vm363 = vcmp.gt.f32.partialorder %v320, 0.0
    %vm364 = vcmp.gt.f32.partialorder %v327, 0.0
    %v365 = vsel %vm363, %v320, 1.0
    %v366 = vsel %vm364, %v327, 1.0
    %v367 = vrcp.pop %v365
    %v368 = vrcp.pop %v366
    %v369 = vmul.f32 %v361, %v367
    %v370 = vmul.f32 %v362, %v368
    %v371 = vmul.f32 %v233, %v369
    %v372 = vmul.f32 %v235, %v370
    %v373 = vsel %vm363, %v371, %v361
    %v374 = vsel %vm364, %v372, %v362
    %v375 = vmul.f32 %v304, %v369
    %v376 = vmul.f32 %v306, %v370
    %v377 = vsel %vm363, %v375, 0.0
    %v378 = vsel %vm364, %v376, 0.0
    %v379 = vld [vmem:[%s2] sm:$0xff]
    %v380 = vld [vmem:[%s2 + $0x8] sm:$0xff]
    %v381 = vld [vmem:[%s2 + $0x10] sm:$0xff]
    %v382 = vld [vmem:[%s2 + $0x18] sm:$0xff]
    %v383 = vld [vmem:[%s2 + $0x20] sm:$0xff]
    %v384 = vld [vmem:[%s2 + $0x28] sm:$0xff]
    %v385 = vld [vmem:[%s2 + $0x30] sm:$0xff]
    %v386 = vld [vmem:[%s2 + $0x38] sm:$0xff]
    %v387 = vld [vmem:[%s2 + $0x40] sm:$0xff]
    %v388 = vld [vmem:[%s2 + $0x48] sm:$0xff]
    %v389 = vld [vmem:[%s2 + $0x50] sm:$0xff]
    %v390 = vld [vmem:[%s2 + $0x58] sm:$0xff]
    %v391 = vld [vmem:[%s2 + $0x60] sm:$0xff]
    %v392 = vld [vmem:[%s2 + $0x68] sm:$0xff]
    %v393 = vld [vmem:[%s2 + $0x70] sm:$0xff]
    %v394 = vld [vmem:[%s2 + $0x78] sm:$0xff]
    %v395 = vld [vmem:[%s2 + $0x80] sm:$0xff]
    %v396 = vld [vmem:[%s2 + $0x88] sm:$0xff]
    %v397 = vld [vmem:[%s2 + $0x90] sm:$0xff]
    %v398 = vld [vmem:[%s2 + $0x98] sm:$0xff]
    %v399 = vld [vmem:[%s2 + $0xa0] sm:$0xff]
    %v400 = vld [vmem:[%s2 + $0xa8] sm:$0xff]
    %v401 = vld [vmem:[%s2 + $0xb0] sm:$0xff]
    %v402 = vld [vmem:[%s2 + $0xb8] sm:$0xff]
    %v403 = vld [vmem:[%s2 + $0xc0] sm:$0xff]
    %v404 = vld [vmem:[%s2 + $0xc8] sm:$0xff]
    %v405 = vld [vmem:[%s2 + $0xd0] sm:$0xff]
    %v406 = vld [vmem:[%s2 + $0xd8] sm:$0xff]
    %v407 = vld [vmem:[%s2 + $0xe0] sm:$0xff]
    %v408 = vld [vmem:[%s2 + $0xe8] sm:$0xff]
    %v409 = vld [vmem:[%s2 + $0xf0] sm:$0xff]
    %v410 = vld [vmem:[%s2 + $0xf8] sm:$0xff]
    %v411 = vld [vmem:[%s2 + $0x100] sm:$0xff]
    %v412 = vld [vmem:[%s2 + $0x108] sm:$0xff]
    %v413 = vld [vmem:[%s2 + $0x110] sm:$0xff]
    %v414 = vld [vmem:[%s2 + $0x118] sm:$0xff]
    %v415 = vld [vmem:[%s2 + $0x120] sm:$0xff]
    %v416 = vld [vmem:[%s2 + $0x128] sm:$0xff]
    %v417 = vld [vmem:[%s2 + $0x130] sm:$0xff]
    %v418 = vld [vmem:[%s2 + $0x138] sm:$0xff]
    %v419 = vld [vmem:[%s2 + $0x140] sm:$0xff]
    %v420 = vld [vmem:[%s2 + $0x148] sm:$0xff]
    %v421 = vld [vmem:[%s2 + $0x150] sm:$0xff]
    %v422 = vld [vmem:[%s2 + $0x158] sm:$0xff]
    %v423 = vld [vmem:[%s2 + $0x160] sm:$0xff]
    %v424 = vld [vmem:[%s2 + $0x168] sm:$0xff]
    %v425 = vld [vmem:[%s2 + $0x170] sm:$0xff]
    %v426 = vld [vmem:[%s2 + $0x178] sm:$0xff]
    %v427 = vld [vmem:[%s2 + $0x180] sm:$0xff]
    %v428 = vld [vmem:[%s2 + $0x188] sm:$0xff]
    %v429 = vld [vmem:[%s2 + $0x190] sm:$0xff]
    %v430 = vld [vmem:[%s2 + $0x198] sm:$0xff]
    %v431 = vld [vmem:[%s2 + $0x1a0] sm:$0xff]
    %v432 = vld [vmem:[%s2 + $0x1a8] sm:$0xff]
    %v433 = vld [vmem:[%s2 + $0x1b0] sm:$0xff]
    %v434 = vld [vmem:[%s2 + $0x1b8] sm:$0xff]
    %v435 = vld [vmem:[%s2 + $0x1c0] sm:$0xff]
    %v436 = vld [vmem:[%s2 + $0x1c8] sm:$0xff]
    %v437 = vld [vmem:[%s2 + $0x1d0] sm:$0xff]
    %v438 = vld [vmem:[%s2 + $0x1d8] sm:$0xff]
    %v439 = vld [vmem:[%s2 + $0x1e0] sm:$0xff]
    %v440 = vld [vmem:[%s2 + $0x1e8] sm:$0xff]
    %v441 = vld [vmem:[%s2 + $0x1f0] sm:$0xff]
    %v442 = vld [vmem:[%s2 + $0x1f8] sm:$0xff]
    %v443 = vld [vmem:[%s2 + $0x200] sm:$0x1]
    %v444 = vld [vmem:[%s2 + $0x208] sm:$0x1]
    %v445 = vld [vmem:[%s2 + $0x210] sm:$0x1]
    %v446 = vld [vmem:[%s2 + $0x218] sm:$0x1]
    %v447 = vlaneseq
    %v448 = vshrl.u32 %v447, 7
    %v449 = vsub.s32 0, %v448
    %v450 = vrot.slane %v373, %v449
    %v451 = vlaneseq
    %v452 = vshrl.u32 %v451, 7
    %v453 = vsub.s32 0, %v452
    %v454 = vrot.slane %v374, %v453
    %v455 = vlaneseq
    %v456 = vshrl.u32 %v455, 7
    %v457 = vsub.s32 0, %v456
    %v458 = vrot.slane %v377, %v457
    %v459 = vlaneseq
    %v460 = vshrl.u32 %v459, 7
    %v461 = vsub.s32 0, %v460
    %v462 = vrot.slane %v378, %v461
    %v463 = vmul.f32 %v379, %v450
    %v464 = vmul.f32 %v380, %v454
    %v465 = vmul.f32 %v381, %v458
    %v466 = vmul.f32 %v382, %v462
    %v467 = vmul.f32 %v383, %v450
    %v468 = vmul.f32 %v384, %v454
    %v469 = vmul.f32 %v385, %v458
    %v470 = vmul.f32 %v386, %v462
    %v471 = vmul.f32 %v387, %v450
    %v472 = vmul.f32 %v388, %v454
    %v473 = vmul.f32 %v389, %v458
    %v474 = vmul.f32 %v390, %v462
    %v475 = vmul.f32 %v391, %v450
    %v476 = vmul.f32 %v392, %v454
    %v477 = vmul.f32 %v393, %v458
    %v478 = vmul.f32 %v394, %v462
    %v479 = vmul.f32 %v395, %v450
    %v480 = vmul.f32 %v396, %v454
    %v481 = vmul.f32 %v397, %v458
    %v482 = vmul.f32 %v398, %v462
    %v483 = vmul.f32 %v399, %v450
    %v484 = vmul.f32 %v400, %v454
    %v485 = vmul.f32 %v401, %v458
    %v486 = vmul.f32 %v402, %v462
    %v487 = vmul.f32 %v403, %v450
    %v488 = vmul.f32 %v404, %v454
    %v489 = vmul.f32 %v405, %v458
    %v490 = vmul.f32 %v406, %v462
    %v491 = vmul.f32 %v407, %v450
    %v492 = vmul.f32 %v408, %v454
    %v493 = vmul.f32 %v409, %v458
    %v494 = vmul.f32 %v410, %v462
    %v495 = vmul.f32 %v411, %v450
    %v496 = vmul.f32 %v412, %v454
    %v497 = vmul.f32 %v413, %v458
    %v498 = vmul.f32 %v414, %v462
    %v499 = vmul.f32 %v415, %v450
    %v500 = vmul.f32 %v416, %v454
    %v501 = vmul.f32 %v417, %v458
    %v502 = vmul.f32 %v418, %v462
    %v503 = vmul.f32 %v419, %v450
    %v504 = vmul.f32 %v420, %v454
    %v505 = vmul.f32 %v421, %v458
    %v506 = vmul.f32 %v422, %v462
    %v507 = vmul.f32 %v423, %v450
    %v508 = vmul.f32 %v424, %v454
    %v509 = vmul.f32 %v425, %v458
    %v510 = vmul.f32 %v426, %v462
    %v511 = vmul.f32 %v427, %v450
    %v512 = vmul.f32 %v428, %v454
    %v513 = vmul.f32 %v429, %v458
    %v514 = vmul.f32 %v430, %v462
    %v515 = vmul.f32 %v431, %v450
    %v516 = vmul.f32 %v432, %v454
    %v517 = vmul.f32 %v433, %v458
    %v518 = vmul.f32 %v434, %v462
    %v519 = vmul.f32 %v435, %v450
    %v520 = vmul.f32 %v436, %v454
    %v521 = vmul.f32 %v437, %v458
    %v522 = vmul.f32 %v438, %v462
    %v523 = vmul.f32 %v439, %v450
    %v524 = vmul.f32 %v440, %v454
    %v525 = vmul.f32 %v441, %v458
    %v526 = vmul.f32 %v442, %v462
    %v527 = vmul.f32 %v443, %v450
    %v528 = vmul.f32 %v444, %v454
    %v529 = vmul.f32 %v445, %v458
    %v530 = vmul.f32 %v446, %v462
    %v531 = vadd.f32 %v463, %v464
    %v532 = vadd.f32 %v531, %v465
    %v533 = vadd.f32 %v532, %v466
    %534 = vadd.xlane.f32.xlu0 %v533
    %v535 = vpop.xlane.xlu0 %534
    %v536 = vadd.f32 %v467, %v468
    %v537 = vadd.f32 %v536, %v469
    %v538 = vadd.f32 %v537, %v470
    %539 = vadd.xlane.f32.xlu0 %v538
    %v540 = vpop.xlane.xlu0 %539
    %v541 = vadd.f32 %v471, %v472
    %v542 = vadd.f32 %v541, %v473
    %v543 = vadd.f32 %v542, %v474
    %544 = vadd.xlane.f32.xlu0 %v543
    %v545 = vpop.xlane.xlu0 %544
    %v546 = vadd.f32 %v475, %v476
    %v547 = vadd.f32 %v546, %v477
    %v548 = vadd.f32 %v547, %v478
    %549 = vadd.xlane.f32.xlu0 %v548
    %v550 = vpop.xlane.xlu0 %549
    %v551 = vadd.f32 %v479, %v480
    %v552 = vadd.f32 %v551, %v481
    %v553 = vadd.f32 %v552, %v482
    %554 = vadd.xlane.f32.xlu0 %v553
    %v555 = vpop.xlane.xlu0 %554
    %v556 = vadd.f32 %v483, %v484
    %v557 = vadd.f32 %v556, %v485
    %v558 = vadd.f32 %v557, %v486
    %559 = vadd.xlane.f32.xlu0 %v558
    %v560 = vpop.xlane.xlu0 %559
    %v561 = vadd.f32 %v487, %v488
    %v562 = vadd.f32 %v561, %v489
    %v563 = vadd.f32 %v562, %v490
    %564 = vadd.xlane.f32.xlu0 %v563
    %v565 = vpop.xlane.xlu0 %564
    %v566 = vadd.f32 %v491, %v492
    %v567 = vadd.f32 %v566, %v493
    %v568 = vadd.f32 %v567, %v494
    %569 = vadd.xlane.f32.xlu0 %v568
    %v570 = vpop.xlane.xlu0 %569
    %v571 = vadd.f32 %v495, %v496
    %v572 = vadd.f32 %v571, %v497
    %v573 = vadd.f32 %v572, %v498
    %574 = vadd.xlane.f32.xlu0 %v573
    %v575 = vpop.xlane.xlu0 %574
    %v576 = vadd.f32 %v499, %v500
    %v577 = vadd.f32 %v576, %v501
    %v578 = vadd.f32 %v577, %v502
    %579 = vadd.xlane.f32.xlu0 %v578
    %v580 = vpop.xlane.xlu0 %579
    %v581 = vadd.f32 %v503, %v504
    %v582 = vadd.f32 %v581, %v505
    %v583 = vadd.f32 %v582, %v506
    %584 = vadd.xlane.f32.xlu0 %v583
    %v585 = vpop.xlane.xlu0 %584
    %v586 = vadd.f32 %v507, %v508
    %v587 = vadd.f32 %v586, %v509
    %v588 = vadd.f32 %v587, %v510
    %589 = vadd.xlane.f32.xlu0 %v588
    %v590 = vpop.xlane.xlu0 %589
    %v591 = vadd.f32 %v511, %v512
    %v592 = vadd.f32 %v591, %v513
    %v593 = vadd.f32 %v592, %v514
    %594 = vadd.xlane.f32.xlu0 %v593
    %v595 = vpop.xlane.xlu0 %594
    %v596 = vadd.f32 %v515, %v516
    %v597 = vadd.f32 %v596, %v517
    %v598 = vadd.f32 %v597, %v518
    %599 = vadd.xlane.f32.xlu0 %v598
    %v600 = vpop.xlane.xlu0 %599
    %v601 = vadd.f32 %v519, %v520
    %v602 = vadd.f32 %v601, %v521
    %v603 = vadd.f32 %v602, %v522
    %604 = vadd.xlane.f32.xlu0 %v603
    %v605 = vpop.xlane.xlu0 %604
    %v606 = vadd.f32 %v523, %v524
    %v607 = vadd.f32 %v606, %v525
    %v608 = vadd.f32 %v607, %v526
    %609 = vadd.xlane.f32.xlu0 %v608
    %v610 = vpop.xlane.xlu0 %609
    %v611 = vsel %vm153, %v527, 0.0
    %v612 = vsel %vm153, %v528, 0.0
    %v613 = vadd.f32 %v611, %v612
    %v614 = vsel %vm153, %v529, 0.0
    %v615 = vadd.f32 %v613, %v614
    %v616 = vsel %vm153, %v530, 0.0
    %v617 = vadd.f32 %v615, %v616
    %618 = vadd.xlane.f32.xlu0 %v617
    %v619 = vpop.xlane.xlu0 %618
    %v620 = vld [vmem:[%s7] sm:$0x1]
    %v621 = vld [vmem:[%s7 + $0x1] sm:$0x1]
    %v622 = vld [vmem:[%s7 + $0x2] sm:$0x1]
    %623 = vst.msk [vmem:[#allocation2] sm:$0xff] %vm150, 0.0
    %624 = vst.msk [vmem:[#allocation2 + $0x8] sm:$0xff] %vm150, 0.0
    %625 = vst.msk [vmem:[#allocation2 + $0x10] sm:$0xff] %vm150, 0.0
    %626 = vst.msk [vmem:[#allocation2 + $0x18] sm:$0xff] %vm150, 0.0
    %627 = vst.msk [vmem:[#allocation2 + $0x20] sm:$0xff] %vm150, 0.0
    %628 = vst.msk [vmem:[#allocation2 + $0x28] sm:$0xff] %vm150, 0.0
    %629 = vst.msk [vmem:[#allocation2 + $0x30] sm:$0xff] %vm150, 0.0
    %630 = vst.msk [vmem:[#allocation2 + $0x38] sm:$0xff] %vm150, 0.0
    %631 = vst.msk [vmem:[#allocation2 + $0x40] sm:$0xff] %vm150, 0.0
    %632 = vst.msk [vmem:[#allocation2 + $0x48] sm:$0xff] %vm150, 0.0
    %633 = vst.msk [vmem:[#allocation2 + $0x50] sm:$0xff] %vm150, 0.0
    %634 = vst.msk [vmem:[#allocation2 + $0x58] sm:$0xff] %vm150, 0.0
    %635 = vst.msk [vmem:[#allocation2 + $0x60] sm:$0xff] %vm150, 0.0
    %636 = vst.msk [vmem:[#allocation2 + $0x68] sm:$0xff] %vm150, 0.0
    %637 = vst.msk [vmem:[#allocation2 + $0x70] sm:$0xff] %vm150, 0.0
    %638 = vst.msk [vmem:[#allocation2 + $0x78] sm:$0xff] %vm150, 0.0
    %vm639 = vcmask 4096
    %640 = vst.msk [vmem:[#allocation2 + $0x80] sm:$0x1f] %vm639, 0.0
    %641 = vst.msk [vmem:[#allocation2 + $0x2] sm:$0xff] %vm150, %v535
    %642 = vst.msk [vmem:[#allocation2 + $0xa] sm:$0xff] %vm150, %v540
    %643 = vst.msk [vmem:[#allocation2 + $0x12] sm:$0xff] %vm150, %v545
    %644 = vst.msk [vmem:[#allocation2 + $0x1a] sm:$0xff] %vm150, %v550
    %645 = vst.msk [vmem:[#allocation2 + $0x22] sm:$0xff] %vm150, %v555
    %646 = vst.msk [vmem:[#allocation2 + $0x2a] sm:$0xff] %vm150, %v560
    %647 = vst.msk [vmem:[#allocation2 + $0x32] sm:$0xff] %vm150, %v565
    %648 = vst.msk [vmem:[#allocation2 + $0x3a] sm:$0xff] %vm150, %v570
    %649 = vst.msk [vmem:[#allocation2 + $0x42] sm:$0xff] %vm150, %v575
    %650 = vst.msk [vmem:[#allocation2 + $0x4a] sm:$0xff] %vm150, %v580
    %651 = vst.msk [vmem:[#allocation2 + $0x52] sm:$0xff] %vm150, %v585
    %652 = vst.msk [vmem:[#allocation2 + $0x5a] sm:$0xff] %vm150, %v590
    %653 = vst.msk [vmem:[#allocation2 + $0x62] sm:$0xff] %vm150, %v595
    %654 = vst.msk [vmem:[#allocation2 + $0x6a] sm:$0xff] %vm150, %v600
    %655 = vst.msk [vmem:[#allocation2 + $0x72] sm:$0xff] %vm150, %v605
    %656 = vst.msk [vmem:[#allocation2 + $0x7a] sm:$0xff] %vm150, %v610
    %vm657 = vcmask 0
    %658 = vst.msk [vmem:[#allocation2 + $0x82] sm:$0x1] %vm657, %v619
    %v659 = vld [vmem:[#allocation2] ss:$2 sm:$0xff]
    %s660 = scalar_lea.vmem [#allocation2], 16
    %v661 = vld [vmem:[%s660] ss:$2 sm:$0xff]
    %s662 = scalar_lea.vmem [#allocation2], 32
    %v663 = vld [vmem:[%s662] ss:$2 sm:$0xff]
    %s664 = scalar_lea.vmem [#allocation2], 48
    %v665 = vld [vmem:[%s664] ss:$2 sm:$0xff]
    %s666 = scalar_lea.vmem [#allocation2], 64
    %v667 = vld [vmem:[%s666] ss:$2 sm:$0xff]
    %s668 = scalar_lea.vmem [#allocation2], 80
    %v669 = vld [vmem:[%s668] ss:$2 sm:$0xff]
    %s670 = scalar_lea.vmem [#allocation2], 96
    %v671 = vld [vmem:[%s670] ss:$2 sm:$0xff]
    %s672 = scalar_lea.vmem [#allocation2], 112
    %v673 = vld [vmem:[%s672] ss:$2 sm:$0xff]
    %s674 = scalar_lea.vmem [#allocation2], 128
    %v675 = vld [vmem:[%s674] ss:$2 sm:$0x1]
    %s676 = scalar_lea.vmem [#allocation2], 1
    %v677 = vld [vmem:[%s676] ss:$2 sm:$0xff]
    %s678 = scalar_lea.vmem [#allocation2], 17
    %v679 = vld [vmem:[%s678] ss:$2 sm:$0xff]
    %s680 = scalar_lea.vmem [#allocation2], 33
    %v681 = vld [vmem:[%s680] ss:$2 sm:$0xff]
    %s682 = scalar_lea.vmem [#allocation2], 49
    %v683 = vld [vmem:[%s682] ss:$2 sm:$0xff]
    %s684 = scalar_lea.vmem [#allocation2], 65
    %v685 = vld [vmem:[%s684] ss:$2 sm:$0xff]
    %s686 = scalar_lea.vmem [#allocation2], 81
    %v687 = vld [vmem:[%s686] ss:$2 sm:$0xff]
    %s688 = scalar_lea.vmem [#allocation2], 97
    %v689 = vld [vmem:[%s688] ss:$2 sm:$0xff]
    %s690 = scalar_lea.vmem [#allocation2], 113
    %v691 = vld [vmem:[%s690] ss:$2 sm:$0xff]
    %s692 = scalar_lea.vmem [#allocation2], 129
    %v693 = vld [vmem:[%s692] ss:$2 sm:$0x1]
    %s694 = scalar_lea.vmem [#allocation2], 2
    %v695 = vld [vmem:[%s694] ss:$2 sm:$0xff]
    %s696 = scalar_lea.vmem [#allocation2], 18
    %v697 = vld [vmem:[%s696] ss:$2 sm:$0xff]
    %s698 = scalar_lea.vmem [#allocation2], 34
    %v699 = vld [vmem:[%s698] ss:$2 sm:$0xff]
    %s700 = scalar_lea.vmem [#allocation2], 50
    %v701 = vld [vmem:[%s700] ss:$2 sm:$0xff]
    %s702 = scalar_lea.vmem [#allocation2], 66
    %v703 = vld [vmem:[%s702] ss:$2 sm:$0xff]
    %s704 = scalar_lea.vmem [#allocation2], 82
    %v705 = vld [vmem:[%s704] ss:$2 sm:$0xff]
    %s706 = scalar_lea.vmem [#allocation2], 98
    %v707 = vld [vmem:[%s706] ss:$2 sm:$0xff]
    %s708 = scalar_lea.vmem [#allocation2], 114
    %v709 = vld [vmem:[%s708] ss:$2 sm:$0xff]
    %s710 = scalar_lea.vmem [#allocation2], 130
    %v711 = vld [vmem:[%s710] ss:$2 sm:$0x1]
    %s712 = scalar_lea.vmem [#allocation2], 3
    %v713 = vld [vmem:[%s712] ss:$2 sm:$0xff]
    %s714 = scalar_lea.vmem [#allocation2], 19
    %v715 = vld [vmem:[%s714] ss:$2 sm:$0xff]
    %s716 = scalar_lea.vmem [#allocation2], 35
    %v717 = vld [vmem:[%s716] ss:$2 sm:$0xff]
    %s718 = scalar_lea.vmem [#allocation2], 51
    %v719 = vld [vmem:[%s718] ss:$2 sm:$0xff]
    %s720 = scalar_lea.vmem [#allocation2], 67
    %v721 = vld [vmem:[%s720] ss:$2 sm:$0xff]
    %s722 = scalar_lea.vmem [#allocation2], 83
    %v723 = vld [vmem:[%s722] ss:$2 sm:$0xff]
    %s724 = scalar_lea.vmem [#allocation2], 99
    %v725 = vld [vmem:[%s724] ss:$2 sm:$0xff]
    %s726 = scalar_lea.vmem [#allocation2], 115
    %v727 = vld [vmem:[%s726] ss:$2 sm:$0xff]
    %s728 = scalar_lea.vmem [#allocation2], 131
    %v729 = vld [vmem:[%s728] ss:$2 sm:$0x1]
    %s730 = scalar_lea.vmem [#allocation2], 4
    %v731 = vld [vmem:[%s730] ss:$2 sm:$0xff]
    %s732 = scalar_lea.vmem [#allocation2], 20
    %v733 = vld [vmem:[%s732] ss:$2 sm:$0xff]
    %s734 = scalar_lea.vmem [#allocation2], 36
    %v735 = vld [vmem:[%s734] ss:$2 sm:$0xff]
    %s736 = scalar_lea.vmem [#allocation2], 52
    %v737 = vld [vmem:[%s736] ss:$2 sm:$0xff]
    %s738 = scalar_lea.vmem [#allocation2], 68
    %v739 = vld [vmem:[%s738] ss:$2 sm:$0xff]
    %s740 = scalar_lea.vmem [#allocation2], 84
    %v741 = vld [vmem:[%s740] ss:$2 sm:$0xff]
    %s742 = scalar_lea.vmem [#allocation2], 100
    %v743 = vld [vmem:[%s742] ss:$2 sm:$0xff]
    %s744 = scalar_lea.vmem [#allocation2], 116
    %v745 = vld [vmem:[%s744] ss:$2 sm:$0xff]
    %s746 = scalar_lea.vmem [#allocation2], 132
    %v747 = vld [vmem:[%s746] ss:$2 sm:$0x1]
    %v748 = vld [vmem:[%s3] sm:$0x1]
    %750 = vset.pattern.permute.xlu0 0
    %751 = vperm.xlu0 %750, %v659
    %v752 = vpop.permute.xlu0 %751
    %755 = vset.pattern.permute.xlu0 0
    %756 = vperm.xlu0 %755, %v661
    %v757 = vpop.permute.xlu0 %756
    %760 = vset.pattern.permute.xlu0 0
    %761 = vperm.xlu0 %760, %v663
    %v762 = vpop.permute.xlu0 %761
    %765 = vset.pattern.permute.xlu0 0
    %766 = vperm.xlu0 %765, %v665
    %v767 = vpop.permute.xlu0 %766
    %770 = vset.pattern.permute.xlu0 0
    %771 = vperm.xlu0 %770, %v667
    %v772 = vpop.permute.xlu0 %771
    %775 = vset.pattern.permute.xlu0 0
    %776 = vperm.xlu0 %775, %v669
    %v777 = vpop.permute.xlu0 %776
    %780 = vset.pattern.permute.xlu0 0
    %781 = vperm.xlu0 %780, %v671
    %v782 = vpop.permute.xlu0 %781
    %785 = vset.pattern.permute.xlu0 0
    %786 = vperm.xlu0 %785, %v673
    %v787 = vpop.permute.xlu0 %786
    %790 = vset.pattern.permute.xlu0 0
    %791 = vperm.xlu0 %790, %v675
    %v792 = vpop.permute.xlu0 %791
    %v794 = vlaneseq
    %v795 = vshrl.u32 %v794, 7
    %v796 = vsub.s32 0, %v795
    %v797 = vrot.slane %v748, %v796
    %v798 = vmul.f32 %v752, %v797
    %v799 = vmul.f32 %v757, %v797
    %v800 = vmul.f32 %v762, %v797
    %v801 = vmul.f32 %v767, %v797
    %v802 = vmul.f32 %v772, %v797
    %v803 = vmul.f32 %v777, %v797
    %v804 = vmul.f32 %v782, %v797
    %v805 = vmul.f32 %v787, %v797
    %v806 = vmul.f32 %v792, %v797
    %v807 = vadd.f32 %v798, 0.0
    %v808 = vadd.f32 %v799, 0.0
    %v809 = vadd.f32 %v800, 0.0
    %v810 = vadd.f32 %v801, 0.0
    %v811 = vadd.f32 %v802, 0.0
    %v812 = vadd.f32 %v803, 0.0
    %v813 = vadd.f32 %v804, 0.0
    %v814 = vadd.f32 %v805, 0.0
    %v815 = vadd.f32 %v806, 0.0
    %v816 = vld [vmem:[%s3 + $0x1] sm:$0x1]
    %818 = vset.pattern.permute.xlu0 0
    %819 = vperm.xlu0 %818, %v677
    %v820 = vpop.permute.xlu0 %819
    %823 = vset.pattern.permute.xlu0 0
    %824 = vperm.xlu0 %823, %v679
    %v825 = vpop.permute.xlu0 %824
    %828 = vset.pattern.permute.xlu0 0
    %829 = vperm.xlu0 %828, %v681
    %v830 = vpop.permute.xlu0 %829
    %833 = vset.pattern.permute.xlu0 0
    %834 = vperm.xlu0 %833, %v683
    %v835 = vpop.permute.xlu0 %834
    %838 = vset.pattern.permute.xlu0 0
    %839 = vperm.xlu0 %838, %v685
    %v840 = vpop.permute.xlu0 %839
    %843 = vset.pattern.permute.xlu0 0
    %844 = vperm.xlu0 %843, %v687
    %v845 = vpop.permute.xlu0 %844
    %848 = vset.pattern.permute.xlu0 0
    %849 = vperm.xlu0 %848, %v689
    %v850 = vpop.permute.xlu0 %849
    %853 = vset.pattern.permute.xlu0 0
    %854 = vperm.xlu0 %853, %v691
    %v855 = vpop.permute.xlu0 %854
    %858 = vset.pattern.permute.xlu0 0
    %859 = vperm.xlu0 %858, %v693
    %v860 = vpop.permute.xlu0 %859
    %v862 = vlaneseq
    %v863 = vshrl.u32 %v862, 7
    %v864 = vsub.s32 0, %v863
    %v865 = vrot.slane %v816, %v864
    %v866 = vmul.f32 %v820, %v865
    %v867 = vmul.f32 %v825, %v865
    %v868 = vmul.f32 %v830, %v865
    %v869 = vmul.f32 %v835, %v865
    %v870 = vmul.f32 %v840, %v865
    %v871 = vmul.f32 %v845, %v865
    %v872 = vmul.f32 %v850, %v865
    %v873 = vmul.f32 %v855, %v865
    %v874 = vmul.f32 %v860, %v865
    %v875 = vadd.f32 %v807, %v866
    %v876 = vadd.f32 %v808, %v867
    %v877 = vadd.f32 %v809, %v868
    %v878 = vadd.f32 %v810, %v869
    %v879 = vadd.f32 %v811, %v870
    %v880 = vadd.f32 %v812, %v871
    %v881 = vadd.f32 %v813, %v872
    %v882 = vadd.f32 %v814, %v873
    %v883 = vadd.f32 %v815, %v874
    %v884 = vld [vmem:[%s3 + $0x2] sm:$0x1]
    %886 = vset.pattern.permute.xlu0 0
    %887 = vperm.xlu0 %886, %v695
    %v888 = vpop.permute.xlu0 %887
    %891 = vset.pattern.permute.xlu0 0
    %892 = vperm.xlu0 %891, %v697
    %v893 = vpop.permute.xlu0 %892
    %896 = vset.pattern.permute.xlu0 0
    %897 = vperm.xlu0 %896, %v699
    %v898 = vpop.permute.xlu0 %897
    %901 = vset.pattern.permute.xlu0 0
    %902 = vperm.xlu0 %901, %v701
    %v903 = vpop.permute.xlu0 %902
    %906 = vset.pattern.permute.xlu0 0
    %907 = vperm.xlu0 %906, %v703
    %v908 = vpop.permute.xlu0 %907
    %911 = vset.pattern.permute.xlu0 0
    %912 = vperm.xlu0 %911, %v705
    %v913 = vpop.permute.xlu0 %912
    %916 = vset.pattern.permute.xlu0 0
    %917 = vperm.xlu0 %916, %v707
    %v918 = vpop.permute.xlu0 %917
    %921 = vset.pattern.permute.xlu0 0
    %922 = vperm.xlu0 %921, %v709
    %v923 = vpop.permute.xlu0 %922
    %926 = vset.pattern.permute.xlu0 0
    %927 = vperm.xlu0 %926, %v711
    %v928 = vpop.permute.xlu0 %927
    %v930 = vlaneseq
    %v931 = vshrl.u32 %v930, 7
    %v932 = vsub.s32 0, %v931
    %v933 = vrot.slane %v884, %v932
    %v934 = vmul.f32 %v888, %v933
    %v935 = vmul.f32 %v893, %v933
    %v936 = vmul.f32 %v898, %v933
    %v937 = vmul.f32 %v903, %v933
    %v938 = vmul.f32 %v908, %v933
    %v939 = vmul.f32 %v913, %v933
    %v940 = vmul.f32 %v918, %v933
    %v941 = vmul.f32 %v923, %v933
    %v942 = vmul.f32 %v928, %v933
    %v943 = vadd.f32 %v875, %v934
    %v944 = vadd.f32 %v876, %v935
    %v945 = vadd.f32 %v877, %v936
    %v946 = vadd.f32 %v878, %v937
    %v947 = vadd.f32 %v879, %v938
    %v948 = vadd.f32 %v880, %v939
    %v949 = vadd.f32 %v881, %v940
    %v950 = vadd.f32 %v882, %v941
    %v951 = vadd.f32 %v883, %v942
    %v952 = vld [vmem:[%s3 + $0x3] sm:$0x1]
    %954 = vset.pattern.permute.xlu0 0
    %955 = vperm.xlu0 %954, %v713
    %v956 = vpop.permute.xlu0 %955
    %959 = vset.pattern.permute.xlu0 0
    %960 = vperm.xlu0 %959, %v715
    %v961 = vpop.permute.xlu0 %960
    %964 = vset.pattern.permute.xlu0 0
    %965 = vperm.xlu0 %964, %v717
    %v966 = vpop.permute.xlu0 %965
    %969 = vset.pattern.permute.xlu0 0
    %970 = vperm.xlu0 %969, %v719
    %v971 = vpop.permute.xlu0 %970
    %974 = vset.pattern.permute.xlu0 0
    %975 = vperm.xlu0 %974, %v721
    %v976 = vpop.permute.xlu0 %975
    %979 = vset.pattern.permute.xlu0 0
    %980 = vperm.xlu0 %979, %v723
    %v981 = vpop.permute.xlu0 %980
    %984 = vset.pattern.permute.xlu0 0
    %985 = vperm.xlu0 %984, %v725
    %v986 = vpop.permute.xlu0 %985
    %989 = vset.pattern.permute.xlu0 0
    %990 = vperm.xlu0 %989, %v727
    %v991 = vpop.permute.xlu0 %990
    %994 = vset.pattern.permute.xlu0 0
    %995 = vperm.xlu0 %994, %v729
    %v996 = vpop.permute.xlu0 %995
    %v998 = vlaneseq
    %v999 = vshrl.u32 %v998, 7
    %v1000 = vsub.s32 0, %v999
    %v1001 = vrot.slane %v952, %v1000
    %v1002 = vmul.f32 %v956, %v1001
    %v1003 = vmul.f32 %v961, %v1001
    %v1004 = vmul.f32 %v966, %v1001
    %v1005 = vmul.f32 %v971, %v1001
    %v1006 = vmul.f32 %v976, %v1001
    %v1007 = vmul.f32 %v981, %v1001
    %v1008 = vmul.f32 %v986, %v1001
    %v1009 = vmul.f32 %v991, %v1001
    %v1010 = vmul.f32 %v996, %v1001
    %v1011 = vadd.f32 %v943, %v1002
    %v1012 = vadd.f32 %v944, %v1003
    %v1013 = vadd.f32 %v945, %v1004
    %v1014 = vadd.f32 %v946, %v1005
    %v1015 = vadd.f32 %v947, %v1006
    %v1016 = vadd.f32 %v948, %v1007
    %v1017 = vadd.f32 %v949, %v1008
    %v1018 = vadd.f32 %v950, %v1009
    %v1019 = vadd.f32 %v951, %v1010
    %v1020 = vld [vmem:[%s3 + $0x4] sm:$0x1]
    %1022 = vset.pattern.permute.xlu0 0
    %1023 = vperm.xlu0 %1022, %v731
    %v1024 = vpop.permute.xlu0 %1023
    %1027 = vset.pattern.permute.xlu0 0
    %1028 = vperm.xlu0 %1027, %v733
    %v1029 = vpop.permute.xlu0 %1028
    %1032 = vset.pattern.permute.xlu0 0
    %1033 = vperm.xlu0 %1032, %v735
    %v1034 = vpop.permute.xlu0 %1033
    %1037 = vset.pattern.permute.xlu0 0
    %1038 = vperm.xlu0 %1037, %v737
    %v1039 = vpop.permute.xlu0 %1038
    %1042 = vset.pattern.permute.xlu0 0
    %1043 = vperm.xlu0 %1042, %v739
    %v1044 = vpop.permute.xlu0 %1043
    %1047 = vset.pattern.permute.xlu0 0
    %1048 = vperm.xlu0 %1047, %v741
    %v1049 = vpop.permute.xlu0 %1048
    %1052 = vset.pattern.permute.xlu0 0
    %1053 = vperm.xlu0 %1052, %v743
    %v1054 = vpop.permute.xlu0 %1053
    %1057 = vset.pattern.permute.xlu0 0
    %1058 = vperm.xlu0 %1057, %v745
    %v1059 = vpop.permute.xlu0 %1058
    %1062 = vset.pattern.permute.xlu0 0
    %1063 = vperm.xlu0 %1062, %v747
    %v1064 = vpop.permute.xlu0 %1063
    %v1066 = vlaneseq
    %v1067 = vshrl.u32 %v1066, 7
    %v1068 = vsub.s32 0, %v1067
    %v1069 = vrot.slane %v1020, %v1068
    %v1070 = vmul.f32 %v1024, %v1069
    %v1071 = vmul.f32 %v1029, %v1069
    %v1072 = vmul.f32 %v1034, %v1069
    %v1073 = vmul.f32 %v1039, %v1069
    %v1074 = vmul.f32 %v1044, %v1069
    %v1075 = vmul.f32 %v1049, %v1069
    %v1076 = vmul.f32 %v1054, %v1069
    %v1077 = vmul.f32 %v1059, %v1069
    %v1078 = vmul.f32 %v1064, %v1069
    %v1079 = vadd.f32 %v1011, %v1070
    %v1080 = vadd.f32 %v1012, %v1071
    %v1081 = vadd.f32 %v1013, %v1072
    %v1082 = vadd.f32 %v1014, %v1073
    %v1083 = vadd.f32 %v1015, %v1074
    %v1084 = vadd.f32 %v1016, %v1075
    %v1085 = vadd.f32 %v1017, %v1076
    %v1086 = vadd.f32 %v1018, %v1077
    %v1087 = vadd.f32 %v1019, %v1078
    %v1089 = vlaneseq
    %v1090 = vshrl.u32 %v1089, 7
    %v1091 = vsub.s32 0, %v1090
    %v1092 = vrot.slane %v620, %v1091
    %v1094 = vadd.f32 %v1079, %v1092
    %v1095 = vadd.f32 %v1080, %v1092
    %v1096 = vadd.f32 %v1081, %v1092
    %v1097 = vadd.f32 %v1082, %v1092
    %v1098 = vadd.f32 %v1083, %v1092
    %v1099 = vadd.f32 %v1084, %v1092
    %v1100 = vadd.f32 %v1085, %v1092
    %v1101 = vadd.f32 %v1086, %v1092
    %v1102 = vadd.f32 %v1087, %v1092
    %vm1103 = vcmp.gt.f32.partialorder %v1094, 0.0
    %vm1104 = vcmp.gt.f32.partialorder %v1095, 0.0
    %vm1105 = vcmp.gt.f32.partialorder %v1096, 0.0
    %vm1106 = vcmp.gt.f32.partialorder %v1097, 0.0
    %vm1107 = vcmp.gt.f32.partialorder %v1098, 0.0
    %vm1108 = vcmp.gt.f32.partialorder %v1099, 0.0
    %vm1109 = vcmp.gt.f32.partialorder %v1100, 0.0
    %vm1110 = vcmp.gt.f32.partialorder %v1101, 0.0
    %vm1111 = vcmp.gt.f32.partialorder %v1102, 0.0
    %v1112 = vmul.f32 %v1094, 0.2
    %v1113 = vmul.f32 %v1095, 0.2
    %v1114 = vmul.f32 %v1096, 0.2
    %v1115 = vmul.f32 %v1097, 0.2
    %v1116 = vmul.f32 %v1098, 0.2
    %v1117 = vmul.f32 %v1099, 0.2
    %v1118 = vmul.f32 %v1100, 0.2
    %v1119 = vmul.f32 %v1101, 0.2
    %v1120 = vmul.f32 %v1102, 0.2
    %v1121 = vsel %vm1103, %v1094, %v1112
    %v1122 = vsel %vm1104, %v1095, %v1113
    %v1123 = vsel %vm1105, %v1096, %v1114
    %v1124 = vsel %vm1106, %v1097, %v1115
    %v1125 = vsel %vm1107, %v1098, %v1116
    %v1126 = vsel %vm1108, %v1099, %v1117
    %v1127 = vsel %vm1109, %v1100, %v1118
    %v1128 = vsel %vm1110, %v1101, %v1119
    %v1129 = vsel %vm1111, %v1102, %v1120
    %vm1130 = vcmask 261120
    %1131 = vst.msk [vmem:[#allocation3] sm:$0xff] %vm1130, 0.0
    %1132 = vst.msk [vmem:[#allocation3 + $0x8] sm:$0xff] %vm1130, 0.0
    %1133 = vst.msk [vmem:[#allocation3 + $0x10] sm:$0xff] %vm1130, 0.0
    %1134 = vst.msk [vmem:[#allocation3 + $0x18] sm:$0xff] %vm1130, 0.0
    %1135 = vst.msk [vmem:[#allocation3 + $0x20] sm:$0xff] %vm1130, 0.0
    %1136 = vst.msk [vmem:[#allocation3 + $0x28] sm:$0xff] %vm1130, 0.0
    %1137 = vst.msk [vmem:[#allocation3 + $0x30] sm:$0xff] %vm1130, 0.0
    %1138 = vst.msk [vmem:[#allocation3 + $0x38] sm:$0xff] %vm1130, 0.0
    %vm1139 = vcmask 258048
    %1140 = vst.msk [vmem:[#allocation3 + $0x40] sm:$0x1f] %vm1139, 0.0
    %1141 = vst.msk [vmem:[#allocation3 + $0x2] sm:$0xff] %vm1130, %v1121
    %1142 = vst.msk [vmem:[#allocation3 + $0xa] sm:$0xff] %vm1130, %v1122
    %1143 = vst.msk [vmem:[#allocation3 + $0x12] sm:$0xff] %vm1130, %v1123
    %1144 = vst.msk [vmem:[#allocation3 + $0x1a] sm:$0xff] %vm1130, %v1124
    %1145 = vst.msk [vmem:[#allocation3 + $0x22] sm:$0xff] %vm1130, %v1125
    %1146 = vst.msk [vmem:[#allocation3 + $0x2a] sm:$0xff] %vm1130, %v1126
    %1147 = vst.msk [vmem:[#allocation3 + $0x32] sm:$0xff] %vm1130, %v1127
    %1148 = vst.msk [vmem:[#allocation3 + $0x3a] sm:$0xff] %vm1130, %v1128
    %vm1149 = vcmask 253952
    %1150 = vst.msk [vmem:[#allocation3 + $0x42] sm:$0x1] %vm1149, %v1129
    %v1151 = vld [vmem:[#allocation3] ss:$2 sm:$0xff]
    %s1152 = scalar_lea.vmem [#allocation3], 16
    %v1153 = vld [vmem:[%s1152] ss:$2 sm:$0xff]
    %s1154 = scalar_lea.vmem [#allocation3], 32
    %v1155 = vld [vmem:[%s1154] ss:$2 sm:$0xff]
    %s1156 = scalar_lea.vmem [#allocation3], 48
    %v1157 = vld [vmem:[%s1156] ss:$2 sm:$0xff]
    %s1158 = scalar_lea.vmem [#allocation3], 64
    %v1159 = vld [vmem:[%s1158] ss:$2 sm:$0x1]
    %s1160 = scalar_lea.vmem [#allocation3], 1
    %v1161 = vld [vmem:[%s1160] ss:$2 sm:$0xff]
    %s1162 = scalar_lea.vmem [#allocation3], 17
    %v1163 = vld [vmem:[%s1162] ss:$2 sm:$0xff]
    %s1164 = scalar_lea.vmem [#allocation3], 33
    %v1165 = vld [vmem:[%s1164] ss:$2 sm:$0xff]
    %s1166 = scalar_lea.vmem [#allocation3], 49
    %v1167 = vld [vmem:[%s1166] ss:$2 sm:$0xff]
    %s1168 = scalar_lea.vmem [#allocation3], 65
    %v1169 = vld [vmem:[%s1168] ss:$2 sm:$0x1]
    %s1170 = scalar_lea.vmem [#allocation3], 2
    %v1171 = vld [vmem:[%s1170] ss:$2 sm:$0xff]
    %s1172 = scalar_lea.vmem [#allocation3], 18
    %v1173 = vld [vmem:[%s1172] ss:$2 sm:$0xff]
    %s1174 = scalar_lea.vmem [#allocation3], 34
    %v1175 = vld [vmem:[%s1174] ss:$2 sm:$0xff]
    %s1176 = scalar_lea.vmem [#allocation3], 50
    %v1177 = vld [vmem:[%s1176] ss:$2 sm:$0xff]
    %s1178 = scalar_lea.vmem [#allocation3], 66
    %v1179 = vld [vmem:[%s1178] ss:$2 sm:$0x1]
    %s1180 = scalar_lea.vmem [#allocation3], 3
    %v1181 = vld [vmem:[%s1180] ss:$2 sm:$0xff]
    %s1182 = scalar_lea.vmem [#allocation3], 19
    %v1183 = vld [vmem:[%s1182] ss:$2 sm:$0xff]
    %s1184 = scalar_lea.vmem [#allocation3], 35
    %v1185 = vld [vmem:[%s1184] ss:$2 sm:$0xff]
    %s1186 = scalar_lea.vmem [#allocation3], 51
    %v1187 = vld [vmem:[%s1186] ss:$2 sm:$0xff]
    %s1188 = scalar_lea.vmem [#allocation3], 67
    %v1189 = vld [vmem:[%s1188] ss:$2 sm:$0x1]
    %s1190 = scalar_lea.vmem [#allocation3], 4
    %v1191 = vld [vmem:[%s1190] ss:$2 sm:$0xff]
    %s1192 = scalar_lea.vmem [#allocation3], 20
    %v1193 = vld [vmem:[%s1192] ss:$2 sm:$0xff]
    %s1194 = scalar_lea.vmem [#allocation3], 36
    %v1195 = vld [vmem:[%s1194] ss:$2 sm:$0xff]
    %s1196 = scalar_lea.vmem [#allocation3], 52
    %v1197 = vld [vmem:[%s1196] ss:$2 sm:$0xff]
    %s1198 = scalar_lea.vmem [#allocation3], 68
    %v1199 = vld [vmem:[%s1198] ss:$2 sm:$0x1]
    %1205 = vrot.lane.b32.xlu0 %v1161, 32
    %v1206 = vpop.permute.xlu0 %1205
    %1207 = vrot.lane.b32.xlu0 %v1163, 32
    %v1208 = vpop.permute.xlu0 %1207
    %1209 = vrot.lane.b32.xlu0 %v1165, 32
    %v1210 = vpop.permute.xlu0 %1209
    %1211 = vrot.lane.b32.xlu0 %v1167, 32
    %v1212 = vpop.permute.xlu0 %1211
    %1213 = vrot.lane.b32.xlu0 %v1169, 32
    %v1214 = vpop.permute.xlu0 %1213
    %1225 = vrot.lane.b32.xlu0 %v1171, 64
    %v1226 = vpop.permute.xlu0 %1225
    %1227 = vrot.lane.b32.xlu0 %v1173, 64
    %v1228 = vpop.permute.xlu0 %1227
    %1229 = vrot.lane.b32.xlu0 %v1175, 64
    %v1230 = vpop.permute.xlu0 %1229
    %1231 = vrot.lane.b32.xlu0 %v1177, 64
    %v1232 = vpop.permute.xlu0 %1231
    %1233 = vrot.lane.b32.xlu0 %v1179, 64
    %v1234 = vpop.permute.xlu0 %1233
    %1245 = vrot.lane.b32.xlu0 %v1181, 96
    %v1246 = vpop.permute.xlu0 %1245
    %1247 = vrot.lane.b32.xlu0 %v1183, 96
    %v1248 = vpop.permute.xlu0 %1247
    %1249 = vrot.lane.b32.xlu0 %v1185, 96
    %v1250 = vpop.permute.xlu0 %1249
    %1251 = vrot.lane.b32.xlu0 %v1187, 96
    %v1252 = vpop.permute.xlu0 %1251
    %1253 = vrot.lane.b32.xlu0 %v1189, 96
    %v1254 = vpop.permute.xlu0 %1253
    %v1260 = vsel %vm1130, %v1151, %v1206
    %v1261 = vsel %vm1130, %v1153, %v1208
    %v1262 = vsel %vm1130, %v1155, %v1210
    %v1263 = vsel %vm1130, %v1157, %v1212
    %v1264 = vsel %vm1130, %v1159, %v1214
    %vm1265 = vcmask 523264
    %v1266 = vsel %vm1265, %v1260, %v1226
    %v1267 = vsel %vm1265, %v1261, %v1228
    %v1268 = vsel %vm1265, %v1262, %v1230
    %v1269 = vsel %vm1265, %v1263, %v1232
    %v1270 = vsel %vm1265, %v1264, %v1234
    %vm1271 = vcmask 785408
    %v1272 = vsel %vm1271, %v1266, %v1246
    %v1273 = vsel %vm1271, %v1267, %v1248
    %v1274 = vsel %vm1271, %v1268, %v1250
    %v1275 = vsel %vm1271, %v1269, %v1252
    %v1276 = vsel %vm1271, %v1270, %v1254
    %v1277 = vld [vmem:[#allocation8] sm:$0xff]
    %v1278 = vld [vmem:[#allocation8 + $0x8] sm:$0xff]
    %v1279 = vld [vmem:[#allocation8 + $0x10] sm:$0xff]
    %v1280 = vld [vmem:[#allocation8 + $0x18] sm:$0xff]
    %v1281 = vld [vmem:[#allocation8 + $0x20] sm:$0xff]
    %v1282 = vld [vmem:[#allocation8 + $0x28] sm:$0xff]
    %v1283 = vld [vmem:[#allocation8 + $0x30] sm:$0xff]
    %v1284 = vld [vmem:[#allocation8 + $0x38] sm:$0xff]
    %v1285 = vld [vmem:[#allocation8 + $0x40] sm:$0xff]
    %v1286 = vld [vmem:[#allocation8 + $0x48] sm:$0xff]
    %v1287 = vld [vmem:[#allocation8 + $0x50] sm:$0xff]
    %v1288 = vld [vmem:[#allocation8 + $0x58] sm:$0xff]
    %v1289 = vld [vmem:[#allocation8 + $0x60] sm:$0xff]
    %v1290 = vld [vmem:[#allocation8 + $0x68] sm:$0xff]
    %v1291 = vld [vmem:[#allocation8 + $0x70] sm:$0xff]
    %v1292 = vld [vmem:[#allocation8 + $0x78] sm:$0xff]
    %v1293 = vld [vmem:[#allocation8 + $0x80] sm:$0xff]
    %v1294 = vld [vmem:[#allocation8 + $0x88] sm:$0xff]
    %v1295 = vld [vmem:[#allocation8 + $0x90] sm:$0xff]
    %v1296 = vld [vmem:[#allocation8 + $0x98] sm:$0xff]
    %v1298 = vlaneseq
    %v1299 = vshrl.u32 %v1298, 7
    %v1300 = vsub.s32 0, %v1299
    %v1301 = vrot.slane %v621, %v1300
    %v1304 = vsel %vm1130, %v1191, 0
    %v1307 = vsel %vm1130, %v1193, 0
    %v1310 = vsel %vm1130, %v1195, 0
    %v1313 = vsel %vm1130, %v1197, 0
    %v1316 = vsel %vm1130, %v1199, 0
    %1318 = vmatprep.subr.mxu0 0.0
    %1319 = vmatpush1.msra.mxu0 %v1277
    %1320 = vmatprep.subr.mxu0 0.0
    %1321 = vmatpush1.msra.mxu0 %v1278
    %1322 = vmatprep.subr.mxu0 0.0
    %1323 = vmatpush1.msra.mxu0 %v1279
    %1324 = vmatprep.subr.mxu0 0.0
    %1325 = vmatpush1.msra.mxu0 %v1280
    %1326 = vmatprep.subr.mxu0 0.0
    %1327 = vmatpush1.msra.mxu0 %v1281
    %1328 = vmatprep.subr.mxu0 0.0
    %1329 = vmatpush1.msra.mxu0 %v1282
    %1330 = vmatprep.subr.mxu0 0.0
    %1331 = vmatpush1.msra.mxu0 %v1283
    %1332 = vmatprep.subr.mxu0 0.0
    %1333 = vmatpush1.msra.mxu0 %v1284
    %1334 = vmatprep.subr.mxu0 0.0
    %1335 = vmatpush1.msra.mxu0 %v1285
    %1336 = vmatprep.subr.mxu0 0.0
    %1337 = vmatpush1.msra.mxu0 %v1286
    %1338 = vmatprep.subr.mxu0 0.0
    %1339 = vmatpush1.msra.mxu0 %v1287
    %1340 = vmatprep.subr.mxu0 0.0
    %1341 = vmatpush1.msra.mxu0 %v1288
    %1342 = vmatprep.subr.mxu0 0.0
    %1343 = vmatpush1.msra.mxu0 %v1289
    %1344 = vmatprep.subr.mxu0 0.0
    %1345 = vmatpush1.msra.mxu0 %v1290
    %1346 = vmatprep.subr.mxu0 0.0
    %1347 = vmatpush1.msra.mxu0 %v1291
    %1348 = vmatprep.subr.mxu0 0.0
    %1349 = vmatpush1.msra.mxu0 %v1292
    %1350 = vmatprep.subr.mxu0 0.0
    %1351 = vmatpush1.msra.mxu0 %v1293
    %1352 = vmatprep.subr.mxu0 0.0
    %1353 = vmatpush1.msra.mxu0 %v1294
    %1354 = vmatprep.subr.mxu0 0.0
    %1355 = vmatpush1.msra.mxu0 %v1295
    %1356 = vmatprep.subr.mxu0 0.0
    %1357 = vmatpush1.msra.mxu0 %v1296
    %1358 = vmatprep.subr.mxu0 0.0
    %1359 = vmatpush1.msra.mxu0 0.0
    %1360 = vmatprep.subr.mxu0 0.0
    %1361 = vmatpush1.msra.mxu0 0.0
    %1362 = vmatprep.subr.mxu0 0.0
    %1363 = vmatpush1.msra.mxu0 0.0
    %1364 = vmatprep.subr.mxu0 0.0
    %1365 = vmatpush1.msra.mxu0 0.0
    %1366 = vmatprep.subr.mxu0 0.0
    %1367 = vmatpush1.msra.mxu0 0.0
    %1368 = vmatprep.subr.mxu0 0.0
    %1369 = vmatpush1.msra.mxu0 0.0
    %1370 = vmatprep.subr.mxu0 0.0
    %1371 = vmatpush1.msra.mxu0 0.0
    %1372 = vmatprep.subr.mxu0 0.0
    %1373 = vmatpush1.msra.mxu0 0.0
    %1374 = vmatprep.subr.mxu0 0.0
    %1375 = vmatpush1.msra.mxu0 0.0
    %1376 = vmatprep.subr.mxu0 0.0
    %1377 = vmatpush1.msra.mxu0 0.0
    %1378 = vmatprep.subr.mxu0 0.0
    %1379 = vmatpush1.msra.mxu0 0.0
    %1380 = vmatprep.subr.mxu0 0.0
    %1381 = vmatpush1.msra.mxu0 0.0
    %1382 = vmatprep.mubr.f32.mxu0 %v1304
    %1383 = vmatmul.mubr.f32.gmra.mrb[0].mxu0 %v1272
    %v1384 = vpop.f32.mrb[0].mxu0
    %v1385 = vadd.f32 %v1301, %v1384
    %v1386 = vpop.f32.mrb[0].mxu0
    %1387 = vmatprep.mubr.f32.mxu0 %v1307
    %1388 = vmatmul.mubr.f32.gmra.mrb[0].mxu0 %v1273
    %v1389 = vpop.f32.mrb[0].mxu0
    %v1390 = vadd.f32 %v1301, %v1389
    %v1391 = vpop.f32.mrb[0].mxu0
    %1392 = vmatprep.mubr.f32.mxu0 %v1310
    %1393 = vmatmul.mubr.f32.gmra.mrb[0].mxu0 %v1274
    %v1394 = vpop.f32.mrb[0].mxu0
    %v1395 = vadd.f32 %v1301, %v1394
    %v1396 = vpop.f32.mrb[0].mxu0
    %1397 = vmatprep.mubr.f32.mxu0 %v1313
    %1398 = vmatmul.mubr.f32.gmra.mrb[0].mxu0 %v1275
    %v1399 = vpop.f32.mrb[0].mxu0
    %v1400 = vadd.f32 %v1301, %v1399
    %v1401 = vpop.f32.mrb[0].mxu0
    %1402 = vmatprep.mubr.f32.mxu0 %v1316
    %1403 = vmatmul.mubr.f32.gmra.mrb[0].mxu0 %v1276
    %v1404 = vpop.f32.mrb[0].mxu0
    %v1405 = vadd.f32 %v1301, %v1404
    %v1406 = vpop.f32.mrb[0].mxu0
    %1407 = vdwg.mxu0
    %vm1408 = vcmp.gt.f32.partialorder %v1385, 0.0
    %vm1409 = vcmp.gt.f32.partialorder %v1390, 0.0
    %vm1410 = vcmp.gt.f32.partialorder %v1395, 0.0
    %vm1411 = vcmp.gt.f32.partialorder %v1400, 0.0
    %vm1412 = vcmp.gt.f32.partialorder %v1405, 0.0
    %v1413 = vmul.f32 %v1385, 0.2
    %v1414 = vmul.f32 %v1390, 0.2
    %v1415 = vmul.f32 %v1395, 0.2
    %v1416 = vmul.f32 %v1400, 0.2
    %v1417 = vmul.f32 %v1405, 0.2
    %v1418 = vsel %vm1408, %v1385, %v1413
    %v1419 = vsel %vm1409, %v1390, %v1414
    %v1420 = vsel %vm1410, %v1395, %v1415
    %v1421 = vsel %vm1411, %v1400, %v1416
    %v1422 = vsel %vm1412, %v1405, %v1417
    %1423 = vst.msk [vmem:[#allocation4] sm:$0xff] %vm1265, 0.0
    %1424 = vst.msk [vmem:[#allocation4 + $0x8] sm:$0xff] %vm1265, 0.0
    %1425 = vst.msk [vmem:[#allocation4 + $0x10] sm:$0xff] %vm1265, 0.0
    %1426 = vst.msk [vmem:[#allocation4 + $0x18] sm:$0xff] %vm1265, 0.0
    %vm1427 = vcmask 520192
    %1428 = vst.msk [vmem:[#allocation4 + $0x20] sm:$0x1f] %vm1427, 0.0
    %1429 = vst.msk [vmem:[#allocation4 + $0x2] sm:$0xff] %vm1265, %v1418
    %1430 = vst.msk [vmem:[#allocation4 + $0xa] sm:$0xff] %vm1265, %v1419
    %1431 = vst.msk [vmem:[#allocation4 + $0x12] sm:$0xff] %vm1265, %v1420
    %1432 = vst.msk [vmem:[#allocation4 + $0x1a] sm:$0xff] %vm1265, %v1421
    %vm1433 = vcmask 516096
    %1434 = vst.msk [vmem:[#allocation4 + $0x22] sm:$0x1] %vm1433, %v1422
    %v1435 = vld [vmem:[#allocation4] ss:$2 sm:$0xff]
    %s1436 = scalar_lea.vmem [#allocation4], 16
    %v1437 = vld [vmem:[%s1436] ss:$2 sm:$0xff]
    %s1438 = scalar_lea.vmem [#allocation4], 32
    %v1439 = vld [vmem:[%s1438] ss:$2 sm:$0x1]
    %s1440 = scalar_lea.vmem [#allocation4], 1
    %v1441 = vld [vmem:[%s1440] ss:$2 sm:$0xff]
    %s1442 = scalar_lea.vmem [#allocation4], 17
    %v1443 = vld [vmem:[%s1442] ss:$2 sm:$0xff]
    %s1444 = scalar_lea.vmem [#allocation4], 33
    %v1445 = vld [vmem:[%s1444] ss:$2 sm:$0x1]
    %s1446 = scalar_lea.vmem [#allocation4], 2
    %v1447 = vld [vmem:[%s1446] ss:$2 sm:$0xff]
    %s1448 = scalar_lea.vmem [#allocation4], 18
    %v1449 = vld [vmem:[%s1448] ss:$2 sm:$0xff]
    %s1450 = scalar_lea.vmem [#allocation4], 34
    %v1451 = vld [vmem:[%s1450] ss:$2 sm:$0x1]
    %s1452 = scalar_lea.vmem [#allocation4], 3
    %v1453 = vld [vmem:[%s1452] ss:$2 sm:$0xff]
    %s1454 = scalar_lea.vmem [#allocation4], 19
    %v1455 = vld [vmem:[%s1454] ss:$2 sm:$0xff]
    %s1456 = scalar_lea.vmem [#allocation4], 35
    %v1457 = vld [vmem:[%s1456] ss:$2 sm:$0x1]
    %s1458 = scalar_lea.vmem [#allocation4], 4
    %v1459 = vld [vmem:[%s1458] ss:$2 sm:$0xff]
    %s1460 = scalar_lea.vmem [#allocation4], 20
    %v1461 = vld [vmem:[%s1460] ss:$2 sm:$0xff]
    %s1462 = scalar_lea.vmem [#allocation4], 36
    %v1463 = vld [vmem:[%s1462] ss:$2 sm:$0x1]
    %1467 = vrot.lane.b32.xlu0 %v1441, 64
    %v1468 = vpop.permute.xlu0 %1467
    %1469 = vrot.lane.b32.xlu0 %v1443, 64
    %v1470 = vpop.permute.xlu0 %1469
    %1471 = vrot.lane.b32.xlu0 %v1445, 64
    %v1472 = vpop.permute.xlu0 %1471
    %1479 = vrot.lane.b32.xlu0 %v1453, 64
    %v1480 = vpop.permute.xlu0 %1479
    %1481 = vrot.lane.b32.xlu0 %v1455, 64
    %v1482 = vpop.permute.xlu0 %1481
    %1483 = vrot.lane.b32.xlu0 %v1457, 64
    %v1484 = vpop.permute.xlu0 %1483
    %v1488 = vsel %vm1265, %v1435, %v1468
    %v1489 = vsel %vm1265, %v1437, %v1470
    %v1490 = vsel %vm1265, %v1439, %v1472
    %v1491 = vsel %vm1265, %v1447, %v1480
    %v1492 = vsel %vm1265, %v1449, %v1482
    %v1493 = vsel %vm1265, %v1451, %v1484
    %v1494 = vld [vmem:[#allocation10] sm:$0xff]
    %v1495 = vld [vmem:[#allocation10 + $0x8] sm:$0xff]
    %v1496 = vld [vmem:[#allocation10 + $0x10] sm:$0xff]
    %v1497 = vld [vmem:[#allocation10 + $0x18] sm:$0xff]
    %v1498 = vld [vmem:[#allocation10 + $0x20] sm:$0xff]
    %v1499 = vld [vmem:[#allocation10 + $0x28] sm:$0xff]
    %v1500 = vld [vmem:[#allocation10 + $0x30] sm:$0xff]
    %v1501 = vld [vmem:[#allocation10 + $0x38] sm:$0xff]
    %v1502 = vld [vmem:[#allocation10 + $0x40] sm:$0xff]
    %v1503 = vld [vmem:[#allocation10 + $0x48] sm:$0xff]
    %v1504 = vld [vmem:[#allocation10 + $0x50] sm:$0xff]
    %v1505 = vld [vmem:[#allocation10 + $0x58] sm:$0xff]
    %v1506 = vld [vmem:[#allocation10 + $0x60] sm:$0xff]
    %v1507 = vld [vmem:[#allocation10 + $0x68] sm:$0xff]
    %v1508 = vld [vmem:[#allocation10 + $0x70] sm:$0xff]
    %v1509 = vld [vmem:[#allocation10 + $0x78] sm:$0xff]
    %v1510 = vld [vmem:[#allocation10 + $0x80] sm:$0xff]
    %v1511 = vld [vmem:[#allocation10 + $0x88] sm:$0xff]
    %v1512 = vld [vmem:[#allocation10 + $0x90] sm:$0xff]
    %v1513 = vld [vmem:[#allocation10 + $0x98] sm:$0xff]
    %v1514 = vld [vmem:[#allocation10 + $0xa0] sm:$0xff]
    %v1515 = vld [vmem:[#allocation10 + $0xa8] sm:$0xff]
    %v1516 = vld [vmem:[#allocation10 + $0xb0] sm:$0xff]
    %v1517 = vld [vmem:[#allocation10 + $0xb8] sm:$0xff]
    %v1518 = vld [vmem:[#allocation10 + $0xc0] sm:$0xff]
    %v1519 = vld [vmem:[#allocation10 + $0xc8] sm:$0xff]
    %v1520 = vld [vmem:[#allocation10 + $0xd0] sm:$0xff]
    %v1521 = vld [vmem:[#allocation10 + $0xd8] sm:$0xff]
    %v1522 = vld [vmem:[#allocation10 + $0xe0] sm:$0xff]
    %v1523 = vld [vmem:[#allocation10 + $0xe8] sm:$0xff]
    %v1524 = vld [vmem:[#allocation10 + $0xf0] sm:$0xff]
    %v1525 = vld [vmem:[#allocation10 + $0xf8] sm:$0xff]
    %v1526 = vld [vmem:[#allocation10 + $0x100] sm:$0xff]
    %v1527 = vld [vmem:[#allocation10 + $0x108] sm:$0xff]
    %v1528 = vld [vmem:[#allocation10 + $0x110] sm:$0xff]
    %v1529 = vld [vmem:[#allocation10 + $0x118] sm:$0xff]
    %v1530 = vld [vmem:[#allocation10 + $0x120] sm:$0xff]
    %v1531 = vld [vmem:[#allocation10 + $0x128] sm:$0xff]
    %v1532 = vld [vmem:[#allocation10 + $0x130] sm:$0xff]
    %v1533 = vld [vmem:[#allocation10 + $0x138] sm:$0xff]
    %v1535 = vlaneseq
    %v1536 = vshrl.u32 %v1535, 7
    %v1537 = vsub.s32 0, %v1536
    %v1538 = vrot.slane %v622, %v1537
    %v1541 = vsel %vm1265, %v1459, 0
    %v1544 = vsel %vm1265, %v1461, 0
    %v1547 = vsel %vm1265, %v1463, 0
    %1549 = vmatprep.subr.mxu0 0.0
    %1550 = vmatpush1.msra.mxu0 %v1494
    %1551 = vmatprep.subr.mxu0 0.0
    %1552 = vmatpush1.msra.mxu0 %v1495
    %1553 = vmatprep.subr.mxu0 0.0
    %1554 = vmatpush1.msra.mxu0 %v1496
    %1555 = vmatprep.subr.mxu0 0.0
    %1556 = vmatpush1.msra.mxu0 %v1497
    %1557 = vmatprep.subr.mxu0 0.0
    %1558 = vmatpush1.msra.mxu0 %v1498
    %1559 = vmatprep.subr.mxu0 0.0
    %1560 = vmatpush1.msra.mxu0 %v1499
    %1561 = vmatprep.subr.mxu0 0.0
    %1562 = vmatpush1.msra.mxu0 %v1500
    %1563 = vmatprep.subr.mxu0 0.0
    %1564 = vmatpush1.msra.mxu0 %v1501
    %1565 = vmatprep.subr.mxu0 0.0
    %1566 = vmatpush1.msra.mxu0 %v1502
    %1567 = vmatprep.subr.mxu0 0.0
    %1568 = vmatpush1.msra.mxu0 %v1503
    %1569 = vmatprep.subr.mxu0 0.0
    %1570 = vmatpush1.msra.mxu0 %v1504
    %1571 = vmatprep.subr.mxu0 0.0
    %1572 = vmatpush1.msra.mxu0 %v1505
    %1573 = vmatprep.subr.mxu0 0.0
    %1574 = vmatpush1.msra.mxu0 %v1506
    %1575 = vmatprep.subr.mxu0 0.0
    %1576 = vmatpush1.msra.mxu0 %v1507
    %1577 = vmatprep.subr.mxu0 0.0
    %1578 = vmatpush1.msra.mxu0 %v1508
    %1579 = vmatprep.subr.mxu0 0.0
    %1580 = vmatpush1.msra.mxu0 %v1509
    %1581 = vmatprep.subr.mxu0 0.0
    %1582 = vmatpush1.msra.mxu0 %v1510
    %1583 = vmatprep.subr.mxu0 0.0
    %1584 = vmatpush1.msra.mxu0 %v1511
    %1585 = vmatprep.subr.mxu0 0.0
    %1586 = vmatpush1.msra.mxu0 %v1512
    %1587 = vmatprep.subr.mxu0 0.0
    %1588 = vmatpush1.msra.mxu0 %v1513
    %1589 = vmatprep.subr.mxu0 0.0
    %1590 = vmatpush1.msra.mxu0 %v1514
    %1591 = vmatprep.subr.mxu0 0.0
    %1592 = vmatpush1.msra.mxu0 %v1515
    %1593 = vmatprep.subr.mxu0 0.0
    %1594 = vmatpush1.msra.mxu0 %v1516
    %1595 = vmatprep.subr.mxu0 0.0
    %1596 = vmatpush1.msra.mxu0 %v1517
    %1597 = vmatprep.subr.mxu0 0.0
    %1598 = vmatpush1.msra.mxu0 %v1518
    %1599 = vmatprep.subr.mxu0 0.0
    %1600 = vmatpush1.msra.mxu0 %v1519
    %1601 = vmatprep.subr.mxu0 0.0
    %1602 = vmatpush1.msra.mxu0 %v1520
    %1603 = vmatprep.subr.mxu0 0.0
    %1604 = vmatpush1.msra.mxu0 %v1521
    %1605 = vmatprep.subr.mxu0 0.0
    %1606 = vmatpush1.msra.mxu0 %v1522
    %1607 = vmatprep.subr.mxu0 0.0
    %1608 = vmatpush1.msra.mxu0 %v1523
    %1609 = vmatprep.subr.mxu0 0.0
    %1610 = vmatpush1.msra.mxu0 %v1524
    %1611 = vmatprep.subr.mxu0 0.0
    %1612 = vmatpush1.msra.mxu0 %v1525
    %1613 = vmatprep.mubr.f32.mxu0 %v1491
    %1614 = vmatmul.mubr.f32.gmra.mrb[0].mxu0 %v1488
    %v1615 = vpop.f32.mrb[0].mxu0
    %v1616 = vadd.f32 %v1538, %v1615
    %v1617 = vpop.f32.mrb[0].mxu0
    %1618 = vmatprep.mubr.f32.mxu0 %v1492
    %1619 = vmatmul.mubr.f32.gmra.mrb[0].mxu0 %v1489
    %v1620 = vpop.f32.mrb[0].mxu0
    %v1621 = vadd.f32 %v1538, %v1620
    %v1622 = vpop.f32.mrb[0].mxu0
    %1623 = vmatprep.mubr.f32.mxu0 %v1493
    %1624 = vmatmul.mubr.f32.gmra.mrb[0].mxu0 %v1490
    %v1625 = vpop.f32.mrb[0].mxu0
    %v1626 = vadd.f32 %v1538, %v1625
    %v1627 = vpop.f32.mrb[0].mxu0
    %1628 = vdwg.mxu0
    %1629 = vmatprep.subr.mxu0 0.0
    %1630 = vmatpush1.msra.mxu0 %v1526
    %1631 = vmatprep.subr.mxu0 0.0
    %1632 = vmatpush1.msra.mxu0 %v1527
    %1633 = vmatprep.subr.mxu0 0.0
    %1634 = vmatpush1.msra.mxu0 %v1528
    %1635 = vmatprep.subr.mxu0 0.0
    %1636 = vmatpush1.msra.mxu0 %v1529
    %1637 = vmatprep.subr.mxu0 0.0
    %1638 = vmatpush1.msra.mxu0 %v1530
    %1639 = vmatprep.subr.mxu0 0.0
    %1640 = vmatpush1.msra.mxu0 %v1531
    %1641 = vmatprep.subr.mxu0 0.0
    %1642 = vmatpush1.msra.mxu0 %v1532
    %1643 = vmatprep.subr.mxu0 0.0
    %1644 = vmatpush1.msra.mxu0 %v1533
    %1645 = vmatprep.subr.mxu0 0.0
    %1646 = vmatpush1.msra.mxu0 0.0
    %1647 = vmatprep.subr.mxu0 0.0
    %1648 = vmatpush1.msra.mxu0 0.0
    %1649 = vmatprep.subr.mxu0 0.0
    %1650 = vmatpush1.msra.mxu0 0.0
    %1651 = vmatprep.subr.mxu0 0.0
    %1652 = vmatpush1.msra.mxu0 0.0
    %1653 = vmatprep.subr.mxu0 0.0
    %1654 = vmatpush1.msra.mxu0 0.0
    %1655 = vmatprep.subr.mxu0 0.0
    %1656 = vmatpush1.msra.mxu0 0.0
    %1657 = vmatprep.subr.mxu0 0.0
    %1658 = vmatpush1.msra.mxu0 0.0
    %1659 = vmatprep.subr.mxu0 0.0
    %1660 = vmatpush1.msra.mxu0 0.0
    %1661 = vmatprep.subr.mxu0 0.0
    %1662 = vmatpush1.msra.mxu0 0.0
    %1663 = vmatprep.subr.mxu0 0.0
    %1664 = vmatpush1.msra.mxu0 0.0
    %1665 = vmatprep.subr.mxu0 0.0
    %1666 = vmatpush1.msra.mxu0 0.0
    %1667 = vmatprep.subr.mxu0 0.0
    %1668 = vmatpush1.msra.mxu0 0.0
    %1669 = vmatprep.subr.mxu0 0.0
    %1670 = vmatpush1.msra.mxu0 0.0
    %1671 = vmatprep.subr.mxu0 0.0
    %1672 = vmatpush1.msra.mxu0 0.0
    %1673 = vmatprep.subr.mxu0 0.0
    %1674 = vmatpush1.msra.mxu0 0.0
    %1675 = vmatprep.subr.mxu0 0.0
    %1676 = vmatpush1.msra.mxu0 0.0
    %1677 = vmatprep.subr.mxu0 0.0
    %1678 = vmatpush1.msra.mxu0 0.0
    %1679 = vmatprep.subr.mxu0 0.0
    %1680 = vmatpush1.msra.mxu0 0.0
    %1681 = vmatprep.subr.mxu0 0.0
    %1682 = vmatpush1.msra.mxu0 0.0
    %1683 = vmatprep.subr.mxu0 0.0
    %1684 = vmatpush1.msra.mxu0 0.0
    %1685 = vmatprep.subr.mxu0 0.0
    %1686 = vmatpush1.msra.mxu0 0.0
    %1687 = vmatprep.subr.mxu0 0.0
    %1688 = vmatpush1.msra.mxu0 0.0
    %1689 = vmatprep.subr.mxu0 0.0
    %1690 = vmatpush1.msra.mxu0 0.0
    %1691 = vmatprep.subr.mxu0 0.0
    %1692 = vmatpush1.msra.mxu0 0.0
    %1693 = vmatprep.mubr.f32.mxu0 0.0
    %1694 = vmatmul.mubr.f32.gmra.mrb[0].mxu0 %v1541
    %v1695 = vpop.f32.mrb[0].mxu0
    %v1696 = vadd.f32 %v1616, %v1695
    %v1697 = vpop.f32.mrb[0].mxu0
    %1698 = vmatprep.mubr.f32.mxu0 0.0
    %1699 = vmatmul.mubr.f32.gmra.mrb[0].mxu0 %v1544
    %v1700 = vpop.f32.mrb[0].mxu0
    %v1701 = vadd.f32 %v1621, %v1700
    %v1702 = vpop.f32.mrb[0].mxu0
    %1703 = vmatprep.mubr.f32.mxu0 0.0
    %1704 = vmatmul.mubr.f32.gmra.mrb[0].mxu0 %v1547
    %v1705 = vpop.f32.mrb[0].mxu0
    %v1706 = vadd.f32 %v1626, %v1705
    %v1707 = vpop.f32.mrb[0].mxu0
    %1708 = vdwg.mxu0
    %vm1709 = vcmp.gt.f32.partialorder %v1696, 0.0
    %vm1710 = vcmp.gt.f32.partialorder %v1701, 0.0
    %vm1711 = vcmp.gt.f32.partialorder %v1706, 0.0
    %v1712 = vmul.f32 %v1696, 0.2
    %v1713 = vmul.f32 %v1701, 0.2
    %v1714 = vmul.f32 %v1706, 0.2
    %v1715 = vsel %vm1709, %v1696, %v1712
    %v1716 = vsel %vm1710, %v1701, %v1713
    %v1717 = vsel %vm1711, %v1706, %v1714
    %v1718 = vadd.f32 %v1715, %v1716
    %v1719 = vsel %vm153, %v1717, 0.0
    %v1720 = vadd.f32 %v1718, %v1719
    %v1721 = vrot.slane %v1720, 4
    %v1722 = vadd.f32 %v1720, %v1721
    %v1723 = vrot.slane %v1722, 2
    %v1724 = vadd.f32 %v1722, %v1723
    %v1725 = vrot.slane %v1724, 1
    %v1726 = vadd.f32 %v1724, %v1725
    %v1727 = vrcp.pop 17.0
    %v1728 = vmul.f32 %v1726, %v1727
    %v1729 = vld [vmem:[%s7 + $0x3] sm:$0x3]
    %v1730 = vld [vmem:[%s7 + $0x5] sm:$0x3]
    %v1731 = vld [vmem:[%s7 + $0x7] sm:$0x1]
    %v1732 = vld [vmem:[%s6] sm:$0xff]
    %v1733 = vld [vmem:[%s6 + $0x8] sm:$0xff]
    %v1734 = vld [vmem:[%s6 + $0x10] sm:$0xff]
    %v1735 = vld [vmem:[%s6 + $0x18] sm:$0xff]
    %v1736 = vld [vmem:[%s6 + $0x20] sm:$0xff]
    %v1737 = vld [vmem:[%s6 + $0x28] sm:$0xff]
    %v1738 = vld [vmem:[%s6 + $0x30] sm:$0xff]
    %v1739 = vld [vmem:[%s6 + $0x38] sm:$0xff]
    %v1740 = vld [vmem:[%s6 + $0x40] sm:$0xff]
    %v1741 = vld [vmem:[%s6 + $0x48] sm:$0xff]
    %v1742 = vld [vmem:[%s6 + $0x50] sm:$0xff]
    %v1743 = vld [vmem:[%s6 + $0x58] sm:$0xff]
    %v1744 = vld [vmem:[%s6 + $0x60] sm:$0xff]
    %v1745 = vld [vmem:[%s6 + $0x68] sm:$0xff]
    %v1746 = vld [vmem:[%s6 + $0x70] sm:$0xff]
    %v1747 = vld [vmem:[%s6 + $0x78] sm:$0xff]
    %v1748 = vld [vmem:[%s6 + $0x80] sm:$0xff]
    %v1749 = vld [vmem:[%s6 + $0x88] sm:$0xff]
    %v1750 = vld [vmem:[%s6 + $0x90] sm:$0xff]
    %v1751 = vld [vmem:[%s6 + $0x98] sm:$0xff]
    %v1752 = vld [vmem:[%s6 + $0xa0] sm:$0xff]
    %v1753 = vld [vmem:[%s6 + $0xa8] sm:$0xff]
    %v1754 = vld [vmem:[%s6 + $0xb0] sm:$0xff]
    %v1755 = vld [vmem:[%s6 + $0xb8] sm:$0xff]
    %v1756 = vld [vmem:[%s6 + $0xc0] sm:$0xff]
    %v1757 = vld [vmem:[%s6 + $0xc8] sm:$0xff]
    %v1758 = vld [vmem:[%s6 + $0xd0] sm:$0xff]
    %v1759 = vld [vmem:[%s6 + $0xd8] sm:$0xff]
    %v1760 = vld [vmem:[%s6 + $0xe0] sm:$0xff]
    %v1761 = vld [vmem:[%s6 + $0xe8] sm:$0xff]
    %v1762 = vld [vmem:[%s6 + $0xf0] sm:$0xff]
    %v1763 = vld [vmem:[%s6 + $0xf8] sm:$0xff]
    %v1765 = vlaneseq
    %v1766 = vshrl.u32 %v1765, 7
    %v1767 = vsub.s32 0, %v1766
    %v1768 = vrot.slane %v1729, %v1767
    %v1769 = vlaneseq
    %v1770 = vshrl.u32 %v1769, 7
    %v1771 = vsub.s32 1, %v1770
    %v1772 = vrot.slane %v1729, %v1771
    %1775 = vmatprep.subr.mxu0 %v1733
    %1776 = vmatpush1.msra.mxu0 %v1732
    %1777 = vmatprep.subr.mxu0 %v1735
    %1778 = vmatpush1.msra.mxu0 %v1734
    %1779 = vmatprep.subr.mxu0 %v1737
    %1780 = vmatpush1.msra.mxu0 %v1736
    %1781 = vmatprep.subr.mxu0 %v1739
    %1782 = vmatpush1.msra.mxu0 %v1738
    %1783 = vmatprep.subr.mxu0 %v1741
    %1784 = vmatpush1.msra.mxu0 %v1740
    %1785 = vmatprep.subr.mxu0 %v1743
    %1786 = vmatpush1.msra.mxu0 %v1742
    %1787 = vmatprep.subr.mxu0 %v1745
    %1788 = vmatpush1.msra.mxu0 %v1744
    %1789 = vmatprep.subr.mxu0 %v1747
    %1790 = vmatpush1.msra.mxu0 %v1746
    %1791 = vmatprep.subr.mxu0 %v1749
    %1792 = vmatpush1.msra.mxu0 %v1748
    %1793 = vmatprep.subr.mxu0 %v1751
    %1794 = vmatpush1.msra.mxu0 %v1750
    %1795 = vmatprep.subr.mxu0 %v1753
    %1796 = vmatpush1.msra.mxu0 %v1752
    %1797 = vmatprep.subr.mxu0 %v1755
    %1798 = vmatpush1.msra.mxu0 %v1754
    %1799 = vmatprep.subr.mxu0 %v1757
    %1800 = vmatpush1.msra.mxu0 %v1756
    %1801 = vmatprep.subr.mxu0 %v1759
    %1802 = vmatpush1.msra.mxu0 %v1758
    %1803 = vmatprep.subr.mxu0 %v1761
    %1804 = vmatpush1.msra.mxu0 %v1760
    %1805 = vmatprep.subr.mxu0 %v1763
    %1806 = vmatpush1.msra.mxu0 %v1762
    %1807 = vmatprep.subr.mxu0 0.0
    %1808 = vmatpush1.msra.mxu0 0.0
    %1809 = vmatprep.subr.mxu0 0.0
    %1810 = vmatpush1.msra.mxu0 0.0
    %1811 = vmatprep.subr.mxu0 0.0
    %1812 = vmatpush1.msra.mxu0 0.0
    %1813 = vmatprep.subr.mxu0 0.0
    %1814 = vmatpush1.msra.mxu0 0.0
    %1815 = vmatprep.subr.mxu0 0.0
    %1816 = vmatpush1.msra.mxu0 0.0
    %1817 = vmatprep.subr.mxu0 0.0
    %1818 = vmatpush1.msra.mxu0 0.0
    %1819 = vmatprep.subr.mxu0 0.0
    %1820 = vmatpush1.msra.mxu0 0.0
    %1821 = vmatprep.subr.mxu0 0.0
    %1822 = vmatpush1.msra.mxu0 0.0
    %1823 = vmatprep.subr.mxu0 0.0
    %1824 = vmatpush1.msra.mxu0 0.0
    %1825 = vmatprep.subr.mxu0 0.0
    %1826 = vmatpush1.msra.mxu0 0.0
    %1827 = vmatprep.subr.mxu0 0.0
    %1828 = vmatpush1.msra.mxu0 0.0
    %1829 = vmatprep.subr.mxu0 0.0
    %1830 = vmatpush1.msra.mxu0 0.0
    %1831 = vmatprep.subr.mxu0 0.0
    %1832 = vmatpush1.msra.mxu0 0.0
    %1833 = vmatprep.subr.mxu0 0.0
    %1834 = vmatpush1.msra.mxu0 0.0
    %1835 = vmatprep.subr.mxu0 0.0
    %1836 = vmatpush1.msra.mxu0 0.0
    %1837 = vmatprep.subr.mxu0 0.0
    %1838 = vmatpush1.msra.mxu0 0.0
    %1839 = vmatprep.mubr.f32.mxu0 0.0
    %1840 = vmatmul.mubr.f32.gmra.mrb[0].mxu0 %v1728
    %v1841 = vpop.f32.mrb[0].mxu0
    %v1842 = vadd.f32 %v1768, %v1841
    %v1843 = vpop.f32.mrb[0].mxu0
    %v1844 = vadd.f32 %v1772, %v1843
    %1845 = vdwg.mxu0
    %vm1846 = vcmp.gt.f32.partialorder %v1842, 0.0
    %vm1847 = vcmp.gt.f32.partialorder %v1844, 0.0
    %v1848 = vmul.f32 %v1842, 0.2
    %v1849 = vmul.f32 %v1844, 0.2
    %v1850 = vsel %vm1846, %v1842, %v1848
    %v1851 = vsel %vm1847, %v1844, %v1849
    %v1853 = vlaneseq
    %v1854 = vshrl.u32 %v1853, 7
    %v1855 = vsub.s32 0, %v1854
    %v1856 = vrot.slane %v1730, %v1855
    %v1857 = vlaneseq
    %v1858 = vshrl.u32 %v1857, 7
    %v1859 = vsub.s32 1, %v1858
    %v1860 = vrot.slane %v1730, %v1859
    %v1863 = vmul.f32 %v1850, %v1856
    %v1864 = vmul.f32 %v1851, %v1860
    %v1865 = vsel %vm153, %v1863, 0.0
    %v1866 = vsel %vm153, %v1864, 0.0
    %v1867 = vadd.f32 %v1865, %v1866
    %1868 = vadd.xlane.f32.xlu0 %v1867
    %v1869 = vpop.xlane.xlu0 %1868
    %v1870 = vadd.f32 %v1869, %v1731
    %1871 = vst.msk [vmem:[#allocation11] sm:$0x1] %vm657, %v1870
    // Predicated region
    $region46: #{instrument_enhanced_generator_forward.1} parent=1 // pred_check
      _
    $region47: #{instrument_enhanced_generator_forward.1} parent=1 // pred_check_branch
      %1873 = sbr.rel (0) target = $region49
    $region48: #{instrument_enhanced_generator_forward.1} parent=1 // pred_region
      %s1875 = ssub.s32 16, 16
      %1876 = vsyncadd [#allocation7], %s1875
      %s1878 = sshll.u32 [#allocation11], 4
      %s1879 = int_to_ptr.vmem [resolvable:$true] %s1878
      %1881 = dma.vmem_to_hbm [thread:$0]  %s1879, 16, %s8, [#allocation7]
    $region49: #{instrument_enhanced_generator_forward.1} parent=1 // pred_fallthru
      _
    // Predicated region
    $region50: #{instrument_enhanced_generator_forward.1} parent=1 // pred_check
      _
    $region51: #{instrument_enhanced_generator_forward.1} parent=1 // pred_check_branch
      %1883 = sbr.rel (0) target = $region53
    $region52: #{instrument_enhanced_generator_forward.1} parent=1 // pred_region
      %1884 = dma.done [#allocation7], 16
    $region53: #{instrument_enhanced_generator_forward.1} parent=1 // pred_fallthru
      _
    %1885 = vsyncpa [#allocation6], 1
    %1886 = vsyncpa [#allocation9], 1
    %1887 = vsyncpa [#allocation7], 1

</llo_original>
